<compile_context>
chip_gen: v7x
topology: tpu7x:2x2x1
jax: 0.10.0
libtpu: 0.0.40
codegen_flags: <defaults>
</compile_context>

<pallas_src>
import numpy as np
import jax
import jax.numpy as jnp
from jax.experimental import pallas as pl
from jax.experimental.pallas import tpu as pltpu


# ----------------------------- config ---------------------------------------

IN_CHANNELS = 4          # feature_channels for p2 and p3
CIN_PAD = 8              # channels zero-padded to one full sublane tile
CONV_DIMS = 8            # DECODER_CONV_DIMS
NUM_CLASSES = 3          # DECODER_NUM_CLASSES


# ----------------------------- kernel helpers --------------------------------

def _conv3x3_relu_im2col(x, w_packed, b, m, W, N):
    """3x3 SAME conv + ReLU in (Cpad, N) layout, N = B*H*W (batch on lanes).

    x:        (Cpad, N) f32 activations (zero-padded channels)
    w_packed: (Cout, 9*Cpad) f32, column t*Cpad + cin  <->  tap t, channel cin
    b:        (Cout, 1) f32
    m:        (9, 1, N) {0,1} per-tap validity mask.  The mask zeroes every
              lane the roll wraps across an image edge (and hence across a
              batch boundary), so pltpu.roll is exact here.
    returns   (Cout, N) f32
    """
    taps = []
    for dy in range(3):
        for dx in range(3):
            t = dy * 3 + dx
            s = (dy - 1) * W + (dx - 1)            # want y[:, i] = x[:, i + s]
            if s == 0:
                taps.append(x)                     # center tap: mask is all-ones
            else:
                taps.append(pltpu.roll(x, shift=(-s) % N, axis=1) * m[t])
    patch = jnp.concatenate(taps, axis=0)          # (9*Cpad, N), aligned pieces
    acc = jnp.dot(w_packed, patch, preferred_element_type=jnp.float32)
    return jnp.maximum(acc + b, 0.0)


def _make_decoder_kernel(W2, N2, W3, N3):
    def kernel(x2_ref, x3_ref,
               w2_ref, b2_ref, m2_ref,
               w3_ref, b3_ref, m3_ref,
               up_ref, wp_ref, bp_ref, o_ref):
        # Single grid step, no batch loop: every weight / mask / upsample load
        # happens exactly once.
        wp = wp_ref[...]                                               # (Ncls, Cd)
        h2 = _conv3x3_relu_im2col(x2_ref[...], w2_ref[...], b2_ref[...],
                                  m2_ref[...], W2, N2)                 # (Cd, N2)
        h3 = _conv3x3_relu_im2col(x3_ref[...], w3_ref[...], b3_ref[...],
                                  m3_ref[...], W3, N3)                 # (Cd, N3)
        # Distribute the (linear) 1x1 predictor before the (linear) upsample:
        #   Wp @ (h2 + h3 @ U) == Wp @ h2 + (Wp @ h3) @ U
        p2 = jnp.dot(wp, h2, preferred_element_type=jnp.float32)       # (Ncls, N2)
        p3 = jnp.dot(wp, h3, preferred_element_type=jnp.float32)       # (Ncls, N3)
        p3u = jnp.dot(p3, up_ref[...], preferred_element_type=jnp.float32)
        o_ref[...] = p2 + p3u + bp_ref[...]                            # lane-dense
    return kernel


# --------------------------- pallas wrapper ----------------------------------

def decoder_forward(f_p2, f_p3, params, up_blk, mask2, mask3):
    """f_p2: (B,Cin,16,16) NCHW, f_p3: (B,Cin,8,8) NCHW -> (B,Ncls,16,16)."""
    B, Cin, H2, W2 = f_p2.shape
    _, _, H3, W3 = f_p3.shape
    HW2, HW3 = H2 * W2, H3 * W3
    N2, N3 = B * HW2, B * HW3
    Cd = params["w_p2"].shape[1]
    Ncls = params["w_pred"].shape[0]

    # NCHW -> (Cpad, B*HW): batch folded onto the lane axis (lane = b*HW + r*W + c),
    # channels zero-padded to a full sublane tile.  Tiny wrapper-side relayout.
    x2 = jnp.transpose(f_p2.reshape(B, Cin, HW2), (1, 0, 2)).reshape(Cin, N2)
    x3 = jnp.transpose(f_p3.reshape(B, Cin, HW3), (1, 0, 2)).reshape(Cin, N3)
    x2 = jnp.pad(x2, ((0, CIN_PAD - Cin), (0, 0)))
    x3 = jnp.pad(x3, ((0, CIN_PAD - Cin), (0, 0)))

    # (9, Cd, Cin) -> im2col-packed (Cd, 9*Cpad), column index = t*Cpad + cin.
    def _pack(w9):
        w9p = jnp.pad(w9, ((0, 0), (0, 0), (0, CIN_PAD - Cin)))
        return jnp.transpose(w9p, (1, 0, 2)).reshape(Cd, 9 * CIN_PAD)

    w2p = _pack(params["w_p2"])
    w3p = _pack(params["w_p3"])

    def _full_spec(shape):
        return pl.BlockSpec(shape, lambda i: (0,) * len(shape))

    kernel = _make_decoder_kernel(W2, N2, W3, N3)
    out = pl.pallas_call(
        kernel,
        out_shape=jax.ShapeDtypeStruct((Ncls, N2), jnp.float32),
        grid=(1,),
        in_specs=[
            _full_spec((CIN_PAD, N2)),       # x2
            _full_spec((CIN_PAD, N3)),       # x3
            _full_spec((Cd, 9 * CIN_PAD)),   # w_p2 (im2col packed)
            _full_spec((Cd, 1)),             # b_p2
            _full_spec((9, 1, N2)),          # mask2
            _full_spec((Cd, 9 * CIN_PAD)),   # w_p3 (im2col packed)
            _full_spec((Cd, 1)),             # b_p3
            _full_spec((9, 1, N3)),          # mask3
            _full_spec((N3, N2)),            # block-diag upsample matrix
            _full_spec((Ncls, Cd)),          # w_pred
            _full_spec((Ncls, 1)),           # b_pred
        ],
        out_specs=_full_spec((Ncls, N2)),
        compiler_params=pltpu.CompilerParams(
            dimension_semantics=("arbitrary",)),
    )(x2, x3,
      w2p, params["b_p2"], mask2,
      w3p, params["b_p3"], mask3,
      up_blk, params["w_pred"], params["b_pred"])

    # (Ncls, B*HW2) -> (B, Ncls, H2, W2): cheap wrapper-side relayout.
    return jnp.transpose(out.reshape(Ncls, B, H2, W2), (1, 0, 2, 3))


# --------------------------- constants / init --------------------------------

def make_tap_masks(H, W):
    """(9, 1, H*W) {0,1} masks: mask[t, 0, i] = 1 iff tap t of pixel i is in-bounds."""
    HW = H * W
    r = np.arange(HW) // W
    c = np.arange(HW) % W
    m = np.zeros((9, 1, HW), np.float32)
    for dy in range(3):
        for dx in range(3):
            oy, ox = dy - 1, dx - 1
            valid = (r + oy >= 0) & (r + oy < H) & (c + ox >= 0) & (c + ox < W)
            m[dy * 3 + dx, 0] = valid.astype(np.float32)
    return m


def bilinear_upsample_matrix(in_size, out_size):
    """nn.Upsample(scale_factor=2, mode='bilinear', align_corners=False) as a matrix."""
    i = np.arange(out_size, dtype=np.float64)
    src = (i + 0.5) * (in_size / out_size) - 0.5
    src = np.maximum(src, 0.0)                     # PyTorch clamps negatives to 0
    i0 = np.minimum(np.floor(src).astype(np.int64), in_size - 1)
    i1 = np.minimum(i0 + 1, in_size - 1)
    frac = src - i0
    U = np.zeros((out_size, in_size), dtype=np.float32)
    U[np.arange(out_size), i0] += (1.0 - frac)
    U[np.arange(out_size), i1] += frac
    return U


def msra_weight(key, shape, fan_out):
    # c2_msra_fill: kaiming_normal_(mode='fan_out', nonlinearity='relu'), bias=0
    std = float(np.sqrt(2.0 / fan_out))
    return std * jax.random.normal(key, shape, dtype=jnp.float32)


def make_params(key):
    k1, k2, k3 = jax.random.split(key, 3)
    return {
        # 3x3 conv weights stored as (9, Cout, Cin), tap t = dy*3 + dx.
        "w_p2": msra_weight(k1, (9, CONV_DIMS, IN_CHANNELS), fan_out=9 * CONV_DIMS),
        "b_p2": jnp.zeros((CONV_DIMS, 1), jnp.float32),
        "w_p3": msra_weight(k2, (9, CONV_DIMS, IN_CHANNELS), fan_out=9 * CONV_DIMS),
        "b_p3": jnp.zeros((CONV_DIMS, 1), jnp.float32),
        # 1x1 predictor stored as (Ncls, Cd).
        "w_pred": msra_weight(k3, (NUM_CLASSES, CONV_DIMS), fan_out=NUM_CLASSES),
        "b_pred": jnp.zeros((NUM_CLASSES, 1), jnp.float32),
    }


# --------------------------- reference (plain JAX) ----------------------------

def ref_decoder(f_p2, f_p3, params, Uh, Uw):
    def conv3x3_relu_ref(x_nchw, w9, b):
        Cout, Cin = w9.shape[1], w9.shape[2]
        # (9, Cout, Cin) -> HWIO (3, 3, Cin, Cout) with H index = dy, W index = dx
        w_hwio = jnp.transpose(w9.reshape(3, 3, Cout, Cin), (0, 1, 3, 2))
        x = jnp.transpose(x_nchw, (0, 2, 3, 1))                 # NCHW -> NHWC
        y = jax.lax.conv_general_dilated(
            x, w_hwio, window_strides=(1, 1), padding="SAME",
            dimension_numbers=("NHWC", "HWIO", "NHWC"))
        return jax.nn.relu(y + b.reshape(-1))

    h2 = conv3x3_relu_ref(f_p2, params["w_p2"], params["b_p2"])      # NHWC
    h3 = conv3x3_relu_ref(f_p3, params["w_p3"], params["b_p3"])      # NHWC
    h3u = jnp.einsum("oh,pw,bhwc->bopc", Uh, Uw, h3)
    s = h2 + h3u
    out = jnp.einsum("bhwc,nc->bhwn", s, params["w_pred"]) + params["b_pred"].reshape(-1)
    return jnp.transpose(out, (0, 3, 1, 2))                          # NCHW


# ------------------------------- main -----------------------------------------

if __name__ == "__main__":
    B = 2
    H2 = W2 = 16    # stride-4 feature map
    H3 = W3 = 8     # stride-8 feature map

    key = jax.random.PRNGKey(0)
    kf2, kf3, kp = jax.random.split(key, 3)
    f_p2 = jax.random.normal(kf2, (B, IN_CHANNELS, H2, W2), jnp.float32)  # NCHW
    f_p3 = jax.random.normal(kf3, (B, IN_CHANNELS, H3, W3), jnp.float32)  # NCHW
    params = make_params(kp)

    # Upsample matrix (bilinear x2, align_corners=False), block-diagonal over the
    # batch because batch is folded onto the lane axis: (B*HW3, B*HW2) = (128, 512).
    Uh = bilinear_upsample_matrix(H3, 2 * H3)
    Uw = bilinear_upsample_matrix(W3, 2 * W3)
    up_T = np.kron(Uh, Uw).T.astype(np.float32)                  # (HW3, HW2)
    up_blk = jnp.asarray(np.kron(np.eye(B, dtype=np.float32), up_T))

    # Per-tap validity masks, host-tiled across the batch (lane = b*HW + pixel).
    mask2 = jnp.asarray(np.tile(make_tap_masks(H2, W2), (1, 1, B)))  # (9,1,B*HW2)
    mask3 = jnp.asarray(np.tile(make_tap_masks(H3, W3), (1, 1, B)))  # (9,1,B*HW3)

    out_nchw = decoder_forward(f_p2, f_p3, params, up_blk, mask2, mask3)
    out_nchw = jax.block_until_ready(out_nchw)
    assert out_nchw.shape == (B, NUM_CLASSES, H2, W2)

    # correctness check against plain-JAX reference
    ref_nchw = ref_decoder(f_p2, f_p3, params, jnp.asarray(Uh), jnp.asarray(Uw))
    np.testing.assert_allclose(np.asarray(out_nchw), np.asarray(ref_nchw),
                               rtol=1e-4, atol=1e-4)

    print("KERNEL_OK")
</pallas_src>

<mosaic_0001>
module attributes {stable_mosaic.version = 11 : i64} {
  func.func @kernel(%arg0: i32, %arg1: memref<8x512xf32, #tpu.memory_space<vmem>>, %arg2: memref<8x128xf32, #tpu.memory_space<vmem>>, %arg3: memref<8x72xf32, #tpu.memory_space<vmem>>, %arg4: memref<8x1xf32, #tpu.memory_space<vmem>>, %arg5: memref<9x1x512xf32, #tpu.memory_space<vmem>>, %arg6: memref<8x72xf32, #tpu.memory_space<vmem>>, %arg7: memref<8x1xf32, #tpu.memory_space<vmem>>, %arg8: memref<9x1x128xf32, #tpu.memory_space<vmem>>, %arg9: memref<128x512xf32, #tpu.memory_space<vmem>>, %arg10: memref<3x8xf32, #tpu.memory_space<vmem>>, %arg11: memref<3x1xf32, #tpu.memory_space<vmem>>, %arg12: memref<3x512xf32, #tpu.memory_space<vmem>>) attributes {dimension_semantics = [#tpu.dimension_semantics<arbitrary>], iteration_bounds = array<i64: 1>, scalar_prefetch = 0 : i64, scratch_operands = 0 : i64, tpu.core_type = #tpu.core_type<tc>, window_params = [{pipeline_mode = #tpu.pipeline_mode<synchronous>, transform_indices = @transform_0, window_bounds = array<i64: 8, 512>}, {pipeline_mode = #tpu.pipeline_mode<synchronous>, transform_indices = @transform_1, window_bounds = array<i64: 8, 128>}, {pipeline_mode = #tpu.pipeline_mode<synchronous>, transform_indices = @transform_2, window_bounds = array<i64: 8, 72>}, {pipeline_mode = #tpu.pipeline_mode<synchronous>, transform_indices = @transform_3, window_bounds = array<i64: 8, 1>}, {pipeline_mode = #tpu.pipeline_mode<synchronous>, transform_indices = @transform_4, window_bounds = array<i64: 9, 1, 512>}, {pipeline_mode = #tpu.pipeline_mode<synchronous>, transform_indices = @transform_5, window_bounds = array<i64: 8, 72>}, {pipeline_mode = #tpu.pipeline_mode<synchronous>, transform_indices = @transform_6, window_bounds = array<i64: 8, 1>}, {pipeline_mode = #tpu.pipeline_mode<synchronous>, transform_indices = @transform_7, window_bounds = array<i64: 9, 1, 128>}, {pipeline_mode = #tpu.pipeline_mode<synchronous>, transform_indices = @transform_8, window_bounds = array<i64: 128, 512>}, {pipeline_mode = #tpu.pipeline_mode<synchronous>, transform_indices = @transform_9, window_bounds = array<i64: 3, 8>}, {pipeline_mode = #tpu.pipeline_mode<synchronous>, transform_indices = @transform_10, window_bounds = array<i64: 3, 1>}, {pipeline_mode = #tpu.pipeline_mode<synchronous>, transform_indices = @transform_11, window_bounds = array<i64: 3, 512>}]} {
    %c0 = arith.constant 0 : index
    %c0_0 = arith.constant 0 : index
    %0 = vector.load %arg10[%c0, %c0_0] : memref<3x8xf32, #tpu.memory_space<vmem>>, vector<3x8xf32>
    %c0_1 = arith.constant 0 : index
    %c0_2 = arith.constant 0 : index
    %1 = vector.load %arg1[%c0_1, %c0_2] : memref<8x512xf32, #tpu.memory_space<vmem>>, vector<8x512xf32>
    %c0_3 = arith.constant 0 : index
    %c0_4 = arith.constant 0 : index
    %2 = vector.load %arg3[%c0_3, %c0_4] : memref<8x72xf32, #tpu.memory_space<vmem>>, vector<8x72xf32>
    %c0_5 = arith.constant 0 : index
    %c0_6 = arith.constant 0 : index
    %3 = vector.load %arg4[%c0_5, %c0_6] : memref<8x1xf32, #tpu.memory_space<vmem>>, vector<8x1xf32>
    %c0_7 = arith.constant 0 : index
    %c0_8 = arith.constant 0 : index
    %c0_9 = arith.constant 0 : index
    %4 = vector.load %arg5[%c0_7, %c0_8, %c0_9] : memref<9x1x512xf32, #tpu.memory_space<vmem>>, vector<9x1x512xf32>
    %c17_i32 = arith.constant 17 : i32
    %5 = tpu.dynamic_rotate %1 by %c17_i32 dim 1 : vector<8x512xf32>, i32 -> vector<8x512xf32>
    %6 = vector.extract_strided_slice %4 {offsets = [0, 0, 0], sizes = [1, 1, 512], strides = [1, 1, 1]} : vector<9x1x512xf32> to vector<1x1x512xf32>
    %7 = vector.shape_cast %6 : vector<1x1x512xf32> to vector<1x512xf32>
    %8 = vector.broadcast %7 : vector<1x512xf32> to vector<8x512xf32>
    %9 = arith.mulf %5, %8 : vector<8x512xf32>
    %c16_i32 = arith.constant 16 : i32
    %10 = tpu.dynamic_rotate %1 by %c16_i32 dim 1 : vector<8x512xf32>, i32 -> vector<8x512xf32>
    %11 = vector.extract_strided_slice %4 {offsets = [1, 0, 0], sizes = [1, 1, 512], strides = [1, 1, 1]} : vector<9x1x512xf32> to vector<1x1x512xf32>
    %12 = vector.shape_cast %11 : vector<1x1x512xf32> to vector<1x512xf32>
    %13 = vector.broadcast %12 : vector<1x512xf32> to vector<8x512xf32>
    %14 = arith.mulf %10, %13 : vector<8x512xf32>
    %c15_i32 = arith.constant 15 : i32
    %15 = tpu.dynamic_rotate %1 by %c15_i32 dim 1 : vector<8x512xf32>, i32 -> vector<8x512xf32>
    %16 = vector.extract_strided_slice %4 {offsets = [2, 0, 0], sizes = [1, 1, 512], strides = [1, 1, 1]} : vector<9x1x512xf32> to vector<1x1x512xf32>
    %17 = vector.shape_cast %16 : vector<1x1x512xf32> to vector<1x512xf32>
    %18 = vector.broadcast %17 : vector<1x512xf32> to vector<8x512xf32>
    %19 = arith.mulf %15, %18 : vector<8x512xf32>
    %c1_i32 = arith.constant 1 : i32
    %20 = tpu.dynamic_rotate %1 by %c1_i32 dim 1 : vector<8x512xf32>, i32 -> vector<8x512xf32>
    %21 = vector.extract_strided_slice %4 {offsets = [3, 0, 0], sizes = [1, 1, 512], strides = [1, 1, 1]} : vector<9x1x512xf32> to vector<1x1x512xf32>
    %22 = vector.shape_cast %21 : vector<1x1x512xf32> to vector<1x512xf32>
    %23 = vector.broadcast %22 : vector<1x512xf32> to vector<8x512xf32>
    %24 = arith.mulf %20, %23 : vector<8x512xf32>
    %c511_i32 = arith.constant 511 : i32
    %25 = tpu.dynamic_rotate %1 by %c511_i32 dim 1 : vector<8x512xf32>, i32 -> vector<8x512xf32>
    %26 = vector.extract_strided_slice %4 {offsets = [5, 0, 0], sizes = [1, 1, 512], strides = [1, 1, 1]} : vector<9x1x512xf32> to vector<1x1x512xf32>
    %27 = vector.shape_cast %26 : vector<1x1x512xf32> to vector<1x512xf32>
    %28 = vector.broadcast %27 : vector<1x512xf32> to vector<8x512xf32>
    %29 = arith.mulf %25, %28 : vector<8x512xf32>
    %c497_i32 = arith.constant 497 : i32
    %30 = tpu.dynamic_rotate %1 by %c497_i32 dim 1 : vector<8x512xf32>, i32 -> vector<8x512xf32>
    %31 = vector.extract_strided_slice %4 {offsets = [6, 0, 0], sizes = [1, 1, 512], strides = [1, 1, 1]} : vector<9x1x512xf32> to vector<1x1x512xf32>
    %32 = vector.shape_cast %31 : vector<1x1x512xf32> to vector<1x512xf32>
    %33 = vector.broadcast %32 : vector<1x512xf32> to vector<8x512xf32>
    %34 = arith.mulf %30, %33 : vector<8x512xf32>
    %c496_i32 = arith.constant 496 : i32
    %35 = tpu.dynamic_rotate %1 by %c496_i32 dim 1 : vector<8x512xf32>, i32 -> vector<8x512xf32>
    %36 = vector.extract_strided_slice %4 {offsets = [7, 0, 0], sizes = [1, 1, 512], strides = [1, 1, 1]} : vector<9x1x512xf32> to vector<1x1x512xf32>
    %37 = vector.shape_cast %36 : vector<1x1x512xf32> to vector<1x512xf32>
    %38 = vector.broadcast %37 : vector<1x512xf32> to vector<8x512xf32>
    %39 = arith.mulf %35, %38 : vector<8x512xf32>
    %c495_i32 = arith.constant 495 : i32
    %40 = tpu.dynamic_rotate %1 by %c495_i32 dim 1 : vector<8x512xf32>, i32 -> vector<8x512xf32>
    %41 = vector.extract_strided_slice %4 {offsets = [8, 0, 0], sizes = [1, 1, 512], strides = [1, 1, 1]} : vector<9x1x512xf32> to vector<1x1x512xf32>
    %42 = vector.shape_cast %41 : vector<1x1x512xf32> to vector<1x512xf32>
    %43 = vector.broadcast %42 : vector<1x512xf32> to vector<8x512xf32>
    %44 = arith.mulf %40, %43 : vector<8x512xf32>
    %45 = tpu.concatenate %9, %14, %19, %24, %1, %29, %34, %39, %44 in 0 : vector<8x512xf32>, vector<8x512xf32>, vector<8x512xf32>, vector<8x512xf32>, vector<8x512xf32>, vector<8x512xf32>, vector<8x512xf32>, vector<8x512xf32>, vector<8x512xf32> -> vector<72x512xf32>
    %cst = arith.constant dense<0.000000e+00> : vector<8x512xf32>
    %46 = tpu.matmul %2, %45, %cst {dimension_numbers = #tpu.dot_dimension_numbers<[1], [0], [0], [1], [0, 0, 1, 1], [], []>} : vector<8x72xf32>, vector<72x512xf32>, vector<8x512xf32> -> vector<8x512xf32>
    %47 = vector.broadcast %3 : vector<8x1xf32> to vector<8x512xf32>
    %48 = arith.addf %46, %47 : vector<8x512xf32>
    %cst_10 = arith.constant 0.000000e+00 : f32
    %49 = vector.broadcast %cst_10 : f32 to vector<8x512xf32>
    %50 = arith.maximumf %48, %49 : vector<8x512xf32>
    %c0_11 = arith.constant 0 : index
    %c0_12 = arith.constant 0 : index
    %51 = vector.load %arg2[%c0_11, %c0_12] : memref<8x128xf32, #tpu.memory_space<vmem>>, vector<8x128xf32>
    %c0_13 = arith.constant 0 : index
    %c0_14 = arith.constant 0 : index
    %52 = vector.load %arg6[%c0_13, %c0_14] : memref<8x72xf32, #tpu.memory_space<vmem>>, vector<8x72xf32>
    %c0_15 = arith.constant 0 : index
    %c0_16 = arith.constant 0 : index
    %53 = vector.load %arg7[%c0_15, %c0_16] : memref<8x1xf32, #tpu.memory_space<vmem>>, vector<8x1xf32>
    %c0_17 = arith.constant 0 : index
    %c0_18 = arith.constant 0 : index
    %c0_19 = arith.constant 0 : index
    %54 = vector.load %arg8[%c0_17, %c0_18, %c0_19] : memref<9x1x128xf32, #tpu.memory_space<vmem>>, vector<9x1x128xf32>
    %c9_i32 = arith.constant 9 : i32
    %55 = tpu.dynamic_rotate %51 by %c9_i32 dim 1 : vector<8x128xf32>, i32 -> vector<8x128xf32>
    %56 = vector.extract_strided_slice %54 {offsets = [0, 0, 0], sizes = [1, 1, 128], strides = [1, 1, 1]} : vector<9x1x128xf32> to vector<1x1x128xf32>
    %57 = vector.shape_cast %56 : vector<1x1x128xf32> to vector<1x128xf32>
    %58 = vector.broadcast %57 : vector<1x128xf32> to vector<8x128xf32>
    %59 = arith.mulf %55, %58 : vector<8x128xf32>
    %c8_i32 = arith.constant 8 : i32
    %60 = tpu.dynamic_rotate %51 by %c8_i32 dim 1 : vector<8x128xf32>, i32 -> vector<8x128xf32>
    %61 = vector.extract_strided_slice %54 {offsets = [1, 0, 0], sizes = [1, 1, 128], strides = [1, 1, 1]} : vector<9x1x128xf32> to vector<1x1x128xf32>
    %62 = vector.shape_cast %61 : vector<1x1x128xf32> to vector<1x128xf32>
    %63 = vector.broadcast %62 : vector<1x128xf32> to vector<8x128xf32>
    %64 = arith.mulf %60, %63 : vector<8x128xf32>
    %c7_i32 = arith.constant 7 : i32
    %65 = tpu.dynamic_rotate %51 by %c7_i32 dim 1 : vector<8x128xf32>, i32 -> vector<8x128xf32>
    %66 = vector.extract_strided_slice %54 {offsets = [2, 0, 0], sizes = [1, 1, 128], strides = [1, 1, 1]} : vector<9x1x128xf32> to vector<1x1x128xf32>
    %67 = vector.shape_cast %66 : vector<1x1x128xf32> to vector<1x128xf32>
    %68 = vector.broadcast %67 : vector<1x128xf32> to vector<8x128xf32>
    %69 = arith.mulf %65, %68 : vector<8x128xf32>
    %c1_i32_20 = arith.constant 1 : i32
    %70 = tpu.dynamic_rotate %51 by %c1_i32_20 dim 1 : vector<8x128xf32>, i32 -> vector<8x128xf32>
    %71 = vector.extract_strided_slice %54 {offsets = [3, 0, 0], sizes = [1, 1, 128], strides = [1, 1, 1]} : vector<9x1x128xf32> to vector<1x1x128xf32>
    %72 = vector.shape_cast %71 : vector<1x1x128xf32> to vector<1x128xf32>
    %73 = vector.broadcast %72 : vector<1x128xf32> to vector<8x128xf32>
    %74 = arith.mulf %70, %73 : vector<8x128xf32>
    %c127_i32 = arith.constant 127 : i32
    %75 = tpu.dynamic_rotate %51 by %c127_i32 dim 1 : vector<8x128xf32>, i32 -> vector<8x128xf32>
    %76 = vector.extract_strided_slice %54 {offsets = [5, 0, 0], sizes = [1, 1, 128], strides = [1, 1, 1]} : vector<9x1x128xf32> to vector<1x1x128xf32>
    %77 = vector.shape_cast %76 : vector<1x1x128xf32> to vector<1x128xf32>
    %78 = vector.broadcast %77 : vector<1x128xf32> to vector<8x128xf32>
    %79 = arith.mulf %75, %78 : vector<8x128xf32>
    %c121_i32 = arith.constant 121 : i32
    %80 = tpu.dynamic_rotate %51 by %c121_i32 dim 1 : vector<8x128xf32>, i32 -> vector<8x128xf32>
    %81 = vector.extract_strided_slice %54 {offsets = [6, 0, 0], sizes = [1, 1, 128], strides = [1, 1, 1]} : vector<9x1x128xf32> to vector<1x1x128xf32>
    %82 = vector.shape_cast %81 : vector<1x1x128xf32> to vector<1x128xf32>
    %83 = vector.broadcast %82 : vector<1x128xf32> to vector<8x128xf32>
    %84 = arith.mulf %80, %83 : vector<8x128xf32>
    %c120_i32 = arith.constant 120 : i32
    %85 = tpu.dynamic_rotate %51 by %c120_i32 dim 1 : vector<8x128xf32>, i32 -> vector<8x128xf32>
    %86 = vector.extract_strided_slice %54 {offsets = [7, 0, 0], sizes = [1, 1, 128], strides = [1, 1, 1]} : vector<9x1x128xf32> to vector<1x1x128xf32>
    %87 = vector.shape_cast %86 : vector<1x1x128xf32> to vector<1x128xf32>
    %88 = vector.broadcast %87 : vector<1x128xf32> to vector<8x128xf32>
    %89 = arith.mulf %85, %88 : vector<8x128xf32>
    %c119_i32 = arith.constant 119 : i32
    %90 = tpu.dynamic_rotate %51 by %c119_i32 dim 1 : vector<8x128xf32>, i32 -> vector<8x128xf32>
    %91 = vector.extract_strided_slice %54 {offsets = [8, 0, 0], sizes = [1, 1, 128], strides = [1, 1, 1]} : vector<9x1x128xf32> to vector<1x1x128xf32>
    %92 = vector.shape_cast %91 : vector<1x1x128xf32> to vector<1x128xf32>
    %93 = vector.broadcast %92 : vector<1x128xf32> to vector<8x128xf32>
    %94 = arith.mulf %90, %93 : vector<8x128xf32>
    %95 = tpu.concatenate %59, %64, %69, %74, %51, %79, %84, %89, %94 in 0 : vector<8x128xf32>, vector<8x128xf32>, vector<8x128xf32>, vector<8x128xf32>, vector<8x128xf32>, vector<8x128xf32>, vector<8x128xf32>, vector<8x128xf32>, vector<8x128xf32> -> vector<72x128xf32>
    %cst_21 = arith.constant dense<0.000000e+00> : vector<8x128xf32>
    %96 = tpu.matmul %52, %95, %cst_21 {dimension_numbers = #tpu.dot_dimension_numbers<[1], [0], [0], [1], [0, 0, 1, 1], [], []>} : vector<8x72xf32>, vector<72x128xf32>, vector<8x128xf32> -> vector<8x128xf32>
    %97 = vector.broadcast %53 : vector<8x1xf32> to vector<8x128xf32>
    %98 = arith.addf %96, %97 : vector<8x128xf32>
    %cst_22 = arith.constant 0.000000e+00 : f32
    %99 = vector.broadcast %cst_22 : f32 to vector<8x128xf32>
    %100 = arith.maximumf %98, %99 : vector<8x128xf32>
    %cst_23 = arith.constant dense<0.000000e+00> : vector<3x512xf32>
    %101 = tpu.matmul %0, %50, %cst_23 {dimension_numbers = #tpu.dot_dimension_numbers<[1], [0], [0], [1], [0, 0, 1, 1], [], []>} : vector<3x8xf32>, vector<8x512xf32>, vector<3x512xf32> -> vector<3x512xf32>
    %cst_24 = arith.constant dense<0.000000e+00> : vector<3x128xf32>
    %102 = tpu.matmul %0, %100, %cst_24 {dimension_numbers = #tpu.dot_dimension_numbers<[1], [0], [0], [1], [0, 0, 1, 1], [], []>} : vector<3x8xf32>, vector<8x128xf32>, vector<3x128xf32> -> vector<3x128xf32>
    %c0_25 = arith.constant 0 : index
    %c0_26 = arith.constant 0 : index
    %103 = vector.load %arg9[%c0_25, %c0_26] : memref<128x512xf32, #tpu.memory_space<vmem>>, vector<128x512xf32>
    %cst_27 = arith.constant dense<0.000000e+00> : vector<3x512xf32>
    %104 = tpu.matmul %102, %103, %cst_27 {dimension_numbers = #tpu.dot_dimension_numbers<[1], [0], [0], [1], [0, 0, 1, 1], [], []>} : vector<3x128xf32>, vector<128x512xf32>, vector<3x512xf32> -> vector<3x512xf32>
    %105 = arith.addf %101, %104 : vector<3x512xf32>
    %c0_28 = arith.constant 0 : index
    %c0_29 = arith.constant 0 : index
    %106 = vector.load %arg11[%c0_28, %c0_29] : memref<3x1xf32, #tpu.memory_space<vmem>>, vector<3x1xf32>
    %107 = vector.broadcast %106 : vector<3x1xf32> to vector<3x512xf32>
    %108 = arith.addf %105, %107 : vector<3x512xf32>
    %c0_30 = arith.constant 0 : index
    %c0_31 = arith.constant 0 : index
    %109 = vector.load %arg12[%c0_30, %c0_31] : memref<3x512xf32, #tpu.memory_space<vmem>>, vector<3x512xf32>
    tpu.vector_store %arg12[%c0_30, %c0_31], %108 {strides = array<i32>} : memref<3x512xf32, #tpu.memory_space<vmem>>, vector<3x512xf32>,
    return
  }
  func.func @transform_0(%arg0: i32) -> (i32, i32) {
    %c0_i32 = arith.constant 0 : i32
    %c0_i32_0 = arith.constant 0 : i32
    %c0_i32_1 = arith.constant 0 : i32
    return %c0_i32, %c0_i32_0 : i32, i32
  }
  func.func @transform_1(%arg0: i32) -> (i32, i32) {
    %c0_i32 = arith.constant 0 : i32
    %c0_i32_0 = arith.constant 0 : i32
    %c0_i32_1 = arith.constant 0 : i32
    return %c0_i32, %c0_i32_0 : i32, i32
  }
  func.func @transform_2(%arg0: i32) -> (i32, i32) {
    %c0_i32 = arith.constant 0 : i32
    %c0_i32_0 = arith.constant 0 : i32
    %c0_i32_1 = arith.constant 0 : i32
    return %c0_i32, %c0_i32_0 : i32, i32
  }
  func.func @transform_3(%arg0: i32) -> (i32, i32) {
    %c0_i32 = arith.constant 0 : i32
    %c0_i32_0 = arith.constant 0 : i32
    %c0_i32_1 = arith.constant 0 : i32
    return %c0_i32, %c0_i32_0 : i32, i32
  }
  func.func @transform_4(%arg0: i32) -> (i32, i32, i32) {
    %c0_i32 = arith.constant 0 : i32
    %c0_i32_0 = arith.constant 0 : i32
    %c0_i32_1 = arith.constant 0 : i32
    %c0_i32_2 = arith.constant 0 : i32
    return %c0_i32, %c0_i32_0, %c0_i32_1 : i32, i32, i32
  }
  func.func @transform_5(%arg0: i32) -> (i32, i32) {
    %c0_i32 = arith.constant 0 : i32
    %c0_i32_0 = arith.constant 0 : i32
    %c0_i32_1 = arith.constant 0 : i32
    return %c0_i32, %c0_i32_0 : i32, i32
  }
  func.func @transform_6(%arg0: i32) -> (i32, i32) {
    %c0_i32 = arith.constant 0 : i32
    %c0_i32_0 = arith.constant 0 : i32
    %c0_i32_1 = arith.constant 0 : i32
    return %c0_i32, %c0_i32_0 : i32, i32
  }
  func.func @transform_7(%arg0: i32) -> (i32, i32, i32) {
    %c0_i32 = arith.constant 0 : i32
    %c0_i32_0 = arith.constant 0 : i32
    %c0_i32_1 = arith.constant 0 : i32
    %c0_i32_2 = arith.constant 0 : i32
    return %c0_i32, %c0_i32_0, %c0_i32_1 : i32, i32, i32
  }
  func.func @transform_8(%arg0: i32) -> (i32, i32) {
    %c0_i32 = arith.constant 0 : i32
    %c0_i32_0 = arith.constant 0 : i32
    %c0_i32_1 = arith.constant 0 : i32
    return %c0_i32, %c0_i32_0 : i32, i32
  }
  func.func @transform_9(%arg0: i32) -> (i32, i32) {
    %c0_i32 = arith.constant 0 : i32
    %c0_i32_0 = arith.constant 0 : i32
    %c0_i32_1 = arith.constant 0 : i32
    return %c0_i32, %c0_i32_0 : i32, i32
  }
  func.func @transform_10(%arg0: i32) -> (i32, i32) {
    %c0_i32 = arith.constant 0 : i32
    %c0_i32_0 = arith.constant 0 : i32
    %c0_i32_1 = arith.constant 0 : i32
    return %c0_i32, %c0_i32_0 : i32, i32
  }
  func.func @transform_11(%arg0: i32) -> (i32, i32) {
    %c0_i32 = arith.constant 0 : i32
    %c0_i32_0 = arith.constant 0 : i32
    %c0_i32_1 = arith.constant 0 : i32
    return %c0_i32, %c0_i32_0 : i32, i32
  }
}

</mosaic_0001>

<llo_original>
// kernel: tpu_custom_call.1
$region0: #{tpu_custom_call.1}
  #allocation0 [shape = 'u32[]', space=smem, size = 0x4, offset = 0x4, fixed_abs, tag = 'smem constant byte address 0x4 - core index']
  #allocation1 [shape = 'u32[144,128]{1,0:T(1,128)}', space=vmem, size = 0x12000, scoped, tag = 'internal scratch']
  %s0 = inlined_call_operand.hbm [shape: f32[8,512], index: 0, kind: input, shape index: {}]
  %s1 = inlined_call_operand.hbm [shape: f32[8,128], index: 1, kind: input, shape index: {}]
  %s2 = inlined_call_operand.hbm [shape: f32[8,72], index: 2, kind: input, shape index: {}]
  %s3 = inlined_call_operand.vmem [shape: f32[8,1], index: 3, kind: input, shape index: {}]
  %s4 = inlined_call_operand.vmem [shape: f32[9,1,512], index: 4, kind: input, shape index: {}]
  %s5 = inlined_call_operand.hbm [shape: f32[8,72], index: 5, kind: input, shape index: {}]
  %s6 = inlined_call_operand.vmem [shape: f32[8,1], index: 6, kind: input, shape index: {}]
  %s7 = inlined_call_operand.vmem [shape: f32[9,1,128], index: 7, kind: input, shape index: {}]
  %s8 = inlined_call_operand.hbm [shape: f32[128,512], index: 8, kind: input, shape index: {}]
  %s9 = inlined_call_operand.vmem [shape: f32[3,8], index: 9, kind: input, shape index: {}]
  %s10 = inlined_call_operand.vmem [shape: f32[3,1], index: 10, kind: input, shape index: {}]
  %s11 = inlined_call_operand.hbm [shape: f32[3,512], index: 11, kind: output, shape index: {}]
  %s12 = sld [smem:[#allocation0]]
  $region74: #{tpu_custom_call.1} parent=0
    _
  %s14 = ssub.s32 1, %s12
  %s15 = scalar_select 0, %s14, %s12
  $region1: #{tpu_custom_call.1} parent=0
    #allocation2 [shape = 'u8[16384]{0}', space=vmem, size = 0x4000, scoped, tag = 'input window, operand 0, single buffered']
    #allocation3 [shape = 's32[1]{0}', space=sflag, size = 0x4, scoped, tag = 'scoped memory for tpu_custom_call.1']
    #allocation4 [shape = 's32[1]{0}', space=sflag, size = 0x4, scoped, tag = 'scoped memory for tpu_custom_call.1']
    #allocation5 [shape = 'u8[4096]{0}', space=vmem, size = 0x1000, scoped, tag = 'input window, operand 1, single buffered']
    #allocation6 [shape = 's32[1]{0}', space=sflag, size = 0x4, scoped, tag = 'scoped memory for tpu_custom_call.1']
    #allocation7 [shape = 'u8[4096]{0}', space=vmem, size = 0x1000, scoped, tag = 'input window, operand 2, single buffered']
    #allocation8 [shape = 'u8[4096]{0}', space=vmem, size = 0x1000, scoped, tag = 'input window, operand 5, single buffered']
    #allocation9 [shape = 's32[1]{0}', space=sflag, size = 0x4, scoped, tag = 'scoped memory for tpu_custom_call.1']
    #allocation10 [shape = 'u8[262144]{0}', space=vmem, size = 0x40000, scoped, tag = 'input window, operand 8, single buffered']
    #allocation11 [shape = 'u8[8192]{0}', space=vmem, size = 0x2000, scoped, tag = 'output window, operand 0, single buffered']
    %16 = vsyncpa [#allocation3], 0
    %17 = vsyncpa [#allocation6], 0
    %18 = vsyncpa [#allocation9], 0
    %19 = vsyncpa [#allocation4], 0
    // Predicated region
    $region2: #{tpu_custom_call.1} parent=1 // pred_check
      _
    $region3: #{tpu_custom_call.1} parent=1 // pred_check_branch
      %21 = sbr.rel (0) target = $region5
    $region4: #{tpu_custom_call.1} parent=1 // pred_region
      %s23 = ssub.s32 512, 512
      %24 = vsyncadd [#allocation3], %s23
      %s26 = sshll.u32 [#allocation2], 4
      %s27 = int_to_ptr.vmem [resolvable:$true] %s26
      %29 = dma.hbm_to_vmem [thread:$0]  %s0, 512, %s27, [#allocation3]
    $region5: #{tpu_custom_call.1} parent=1 // pred_fallthru
      _
    // Predicated region
    $region6: #{tpu_custom_call.1} parent=1 // pred_check
      _
    $region7: #{tpu_custom_call.1} parent=1 // pred_check_branch
      %31 = sbr.rel (0) target = $region9
    $region8: #{tpu_custom_call.1} parent=1 // pred_region
      %s33 = ssub.s32 128, 128
      %34 = vsyncadd [#allocation6], %s33
      %s36 = sshll.u32 [#allocation5], 4
      %s37 = int_to_ptr.vmem [resolvable:$true] %s36
      %39 = dma.hbm_to_vmem [thread:$0]  %s1, 128, %s37, [#allocation6]
    $region9: #{tpu_custom_call.1} parent=1 // pred_fallthru
      _
    // Predicated region
    $region10: #{tpu_custom_call.1} parent=1 // pred_check
      _
    $region11: #{tpu_custom_call.1} parent=1 // pred_check_branch
      %41 = sbr.rel (0) target = $region13
    $region12: #{tpu_custom_call.1} parent=1 // pred_region
      %s43 = ssub.s32 128, 128
      %44 = vsyncadd [#allocation6], %s43
      %s46 = sshll.u32 [#allocation7], 4
      %s47 = int_to_ptr.vmem [resolvable:$true] %s46
      %49 = dma.hbm_to_vmem [thread:$0]  %s2, 128, %s47, [#allocation6]
    $region13: #{tpu_custom_call.1} parent=1 // pred_fallthru
      _
    // Predicated region
    $region14: #{tpu_custom_call.1} parent=1 // pred_check
      _
    $region15: #{tpu_custom_call.1} parent=1 // pred_check_branch
      %51 = sbr.rel (0) target = $region17
    $region16: #{tpu_custom_call.1} parent=1 // pred_region
      _
    $region17: #{tpu_custom_call.1} parent=1 // pred_fallthru
      _
    // Predicated region
    $region18: #{tpu_custom_call.1} parent=1 // pred_check
      _
    $region19: #{tpu_custom_call.1} parent=1 // pred_check_branch
      %53 = sbr.rel (0) target = $region21
    $region20: #{tpu_custom_call.1} parent=1 // pred_region
      _
    $region21: #{tpu_custom_call.1} parent=1 // pred_fallthru
      _
    // Predicated region
    $region22: #{tpu_custom_call.1} parent=1 // pred_check
      _
    $region23: #{tpu_custom_call.1} parent=1 // pred_check_branch
      %55 = sbr.rel (0) target = $region25
    $region24: #{tpu_custom_call.1} parent=1 // pred_region
      %s57 = ssub.s32 128, 128
      %58 = vsyncadd [#allocation9], %s57
      %s60 = sshll.u32 [#allocation8], 4
      %s61 = int_to_ptr.vmem [resolvable:$true] %s60
      %63 = dma.hbm_to_vmem [thread:$0]  %s5, 128, %s61, [#allocation9]
    $region25: #{tpu_custom_call.1} parent=1 // pred_fallthru
      _
    // Predicated region
    $region26: #{tpu_custom_call.1} parent=1 // pred_check
      _
    $region27: #{tpu_custom_call.1} parent=1 // pred_check_branch
      %65 = sbr.rel (0) target = $region29
    $region28: #{tpu_custom_call.1} parent=1 // pred_region
      _
    $region29: #{tpu_custom_call.1} parent=1 // pred_fallthru
      _
    // Predicated region
    $region30: #{tpu_custom_call.1} parent=1 // pred_check
      _
    $region31: #{tpu_custom_call.1} parent=1 // pred_check_branch
      %67 = sbr.rel (0) target = $region33
    $region32: #{tpu_custom_call.1} parent=1 // pred_region
      _
    $region33: #{tpu_custom_call.1} parent=1 // pred_fallthru
      _
    // Predicated region
    $region34: #{tpu_custom_call.1} parent=1 // pred_check
      _
    $region35: #{tpu_custom_call.1} parent=1 // pred_check_branch
      %69 = sbr.rel (0) target = $region37
    $region36: #{tpu_custom_call.1} parent=1 // pred_region
      %s71 = ssub.s32 8192, 8192
      %72 = vsyncadd [#allocation9], %s71
      %s73 = sshll.u32 [#allocation10], 4
      %s74 = int_to_ptr.vmem [resolvable:$true] %s73
      %79 = dma.hbm_to_vmem [thread:$0]  %s8, 8192, %s74, [#allocation9], 512, 512, 32
    $region37: #{tpu_custom_call.1} parent=1 // pred_fallthru
      _
    // Predicated region
    $region38: #{tpu_custom_call.1} parent=1 // pred_check
      _
    $region39: #{tpu_custom_call.1} parent=1 // pred_check_branch
      %81 = sbr.rel (0) target = $region41
    $region40: #{tpu_custom_call.1} parent=1 // pred_region
      _
    $region41: #{tpu_custom_call.1} parent=1 // pred_fallthru
      _
    // Predicated region
    $region42: #{tpu_custom_call.1} parent=1 // pred_check
      _
    $region43: #{tpu_custom_call.1} parent=1 // pred_check_branch
      %83 = sbr.rel (0) target = $region45
    $region44: #{tpu_custom_call.1} parent=1 // pred_region
      _
    $region45: #{tpu_custom_call.1} parent=1 // pred_fallthru
      _
    // Predicated region
    $region46: #{tpu_custom_call.1} parent=1 // pred_check
      _
    $region47: #{tpu_custom_call.1} parent=1 // pred_check_branch
      %85 = sbr.rel (0) target = $region49
    $region48: #{tpu_custom_call.1} parent=1 // pred_region
      %86 = dma.done [#allocation3], 512
    $region49: #{tpu_custom_call.1} parent=1 // pred_fallthru
      _
    // Predicated region
    $region50: #{tpu_custom_call.1} parent=1 // pred_check
      _
    $region51: #{tpu_custom_call.1} parent=1 // pred_check_branch
      %88 = sbr.rel (0) target = $region53
    $region52: #{tpu_custom_call.1} parent=1 // pred_region
      %89 = dma.done [#allocation6], 128
    $region53: #{tpu_custom_call.1} parent=1 // pred_fallthru
      _
    // Predicated region
    $region54: #{tpu_custom_call.1} parent=1 // pred_check
      _
    $region55: #{tpu_custom_call.1} parent=1 // pred_check_branch
      %91 = sbr.rel (0) target = $region57
    $region56: #{tpu_custom_call.1} parent=1 // pred_region
      %92 = dma.done [#allocation6], 128
    $region57: #{tpu_custom_call.1} parent=1 // pred_fallthru
      _
    // Predicated region
    $region58: #{tpu_custom_call.1} parent=1 // pred_check
      _
    $region59: #{tpu_custom_call.1} parent=1 // pred_check_branch
      %94 = sbr.rel (0) target = $region61
    $region60: #{tpu_custom_call.1} parent=1 // pred_region
      %95 = dma.done [#allocation9], 128
    $region61: #{tpu_custom_call.1} parent=1 // pred_fallthru
      _
    // Predicated region
    $region62: #{tpu_custom_call.1} parent=1 // pred_check
      _
    $region63: #{tpu_custom_call.1} parent=1 // pred_check_branch
      %97 = sbr.rel (0) target = $region65
    $region64: #{tpu_custom_call.1} parent=1 // pred_region
      %98 = dma.done [#allocation9], 8192
    $region65: #{tpu_custom_call.1} parent=1 // pred_fallthru
      _
    %v99 = vld [vmem:[%s9] sm:$0x7]
    %v100 = vld [vmem:[#allocation2] sm:$0xff]
    %v101 = vld [vmem:[#allocation2 + $0x8] sm:$0xff]
    %v102 = vld [vmem:[#allocation2 + $0x10] sm:$0xff]
    %v103 = vld [vmem:[#allocation2 + $0x18] sm:$0xff]
    %v104 = vld [vmem:[#allocation7] sm:$0xff]
    %v105 = vld [vmem:[%s3] sm:$0xff]
    %v106 = vld [vmem:[%s4] sm:$0xf]
    %v107 = vld [vmem:[%s4 + $0x4] sm:$0xf]
    %v108 = vld [vmem:[%s4 + $0x8] sm:$0xf]
    %v109 = vld [vmem:[%s4 + $0xc] sm:$0xf]
    %v110 = vld [vmem:[%s4 + $0x14] sm:$0xf]
    %v111 = vld [vmem:[%s4 + $0x18] sm:$0xf]
    %v112 = vld [vmem:[%s4 + $0x1c] sm:$0xf]
    %v113 = vld [vmem:[%s4 + $0x20] sm:$0xf]
    %114 = vrot.lane.b32.xlu0 %v100, 17
    %v115 = vpop.permute.xlu0 %114
    %116 = vrot.lane.b32.xlu0 %v101, 17
    %v117 = vpop.permute.xlu0 %116
    %118 = vrot.lane.b32.xlu0 %v102, 17
    %v119 = vpop.permute.xlu0 %118
    %120 = vrot.lane.b32.xlu0 %v103, 17
    %v121 = vpop.permute.xlu0 %120
    %v122 = vlaneseq
    %v123 = vand.u32 %v122, 127
    %vm124 = vcmp.lt.s32.totalorder %v123, 17
    %v125 = vsel %vm124, %v119, %v121
    %v126 = vsel %vm124, %v117, %v119
    %v127 = vsel %vm124, %v115, %v117
    %v128 = vsel %vm124, %v121, %v115
    %v130 = vlaneseq
    %v131 = vshrl.u32 %v130, 7
    %v132 = vsub.s32 0, %v131
    %v133 = vrot.slane %v106, %v132
    %v134 = vlaneseq
    %v135 = vshrl.u32 %v134, 7
    %v136 = vsub.s32 1, %v135
    %v137 = vrot.slane %v106, %v136
    %v138 = vlaneseq
    %v139 = vshrl.u32 %v138, 7
    %v140 = vsub.s32 2, %v139
    %v141 = vrot.slane %v106, %v140
    %v142 = vlaneseq
    %v143 = vshrl.u32 %v142, 7
    %v144 = vsub.s32 3, %v143
    %v145 = vrot.slane %v106, %v144
    %v150 = vmul.f32 %v128, %v133
    %v151 = vmul.f32 %v127, %v137
    %v152 = vmul.f32 %v126, %v141
    %v153 = vmul.f32 %v125, %v145
    %154 = vrot.lane.b32.xlu0 %v100, 16
    %v155 = vpop.permute.xlu0 %154
    %156 = vrot.lane.b32.xlu0 %v101, 16
    %v157 = vpop.permute.xlu0 %156
    %158 = vrot.lane.b32.xlu0 %v102, 16
    %v159 = vpop.permute.xlu0 %158
    %160 = vrot.lane.b32.xlu0 %v103, 16
    %v161 = vpop.permute.xlu0 %160
    %vm162 = vcmp.lt.s32.totalorder %v123, 16
    %v163 = vsel %vm162, %v159, %v161
    %v164 = vsel %vm162, %v157, %v159
    %v165 = vsel %vm162, %v155, %v157
    %v166 = vsel %vm162, %v161, %v155
    %v168 = vlaneseq
    %v169 = vshrl.u32 %v168, 7
    %v170 = vsub.s32 0, %v169
    %v171 = vrot.slane %v107, %v170
    %v172 = vlaneseq
    %v173 = vshrl.u32 %v172, 7
    %v174 = vsub.s32 1, %v173
    %v175 = vrot.slane %v107, %v174
    %v176 = vlaneseq
    %v177 = vshrl.u32 %v176, 7
    %v178 = vsub.s32 2, %v177
    %v179 = vrot.slane %v107, %v178
    %v180 = vlaneseq
    %v181 = vshrl.u32 %v180, 7
    %v182 = vsub.s32 3, %v181
    %v183 = vrot.slane %v107, %v182
    %v188 = vmul.f32 %v166, %v171
    %v189 = vmul.f32 %v165, %v175
    %v190 = vmul.f32 %v164, %v179
    %v191 = vmul.f32 %v163, %v183
    %192 = vrot.lane.b32.xlu0 %v100, 15
    %v193 = vpop.permute.xlu0 %192
    %194 = vrot.lane.b32.xlu0 %v101, 15
    %v195 = vpop.permute.xlu0 %194
    %196 = vrot.lane.b32.xlu0 %v102, 15
    %v197 = vpop.permute.xlu0 %196
    %198 = vrot.lane.b32.xlu0 %v103, 15
    %v199 = vpop.permute.xlu0 %198
    %vm200 = vcmp.lt.s32.totalorder %v123, 15
    %v201 = vsel %vm200, %v197, %v199
    %v202 = vsel %vm200, %v195, %v197
    %v203 = vsel %vm200, %v193, %v195
    %v204 = vsel %vm200, %v199, %v193
    %v206 = vlaneseq
    %v207 = vshrl.u32 %v206, 7
    %v208 = vsub.s32 0, %v207
    %v209 = vrot.slane %v108, %v208
    %v210 = vlaneseq
    %v211 = vshrl.u32 %v210, 7
    %v212 = vsub.s32 1, %v211
    %v213 = vrot.slane %v108, %v212
    %v214 = vlaneseq
    %v215 = vshrl.u32 %v214, 7
    %v216 = vsub.s32 2, %v215
    %v217 = vrot.slane %v108, %v216
    %v218 = vlaneseq
    %v219 = vshrl.u32 %v218, 7
    %v220 = vsub.s32 3, %v219
    %v221 = vrot.slane %v108, %v220
    %v226 = vmul.f32 %v204, %v209
    %v227 = vmul.f32 %v203, %v213
    %v228 = vmul.f32 %v202, %v217
    %v229 = vmul.f32 %v201, %v221
    %230 = vrot.lane.b32.xlu0 %v100, 1
    %v231 = vpop.permute.xlu0 %230
    %232 = vrot.lane.b32.xlu0 %v101, 1
    %v233 = vpop.permute.xlu0 %232
    %234 = vrot.lane.b32.xlu0 %v102, 1
    %v235 = vpop.permute.xlu0 %234
    %236 = vrot.lane.b32.xlu0 %v103, 1
    %v237 = vpop.permute.xlu0 %236
    %vm238 = vcmp.lt.s32.totalorder %v123, 1
    %v239 = vsel %vm238, %v235, %v237
    %v240 = vsel %vm238, %v233, %v235
    %v241 = vsel %vm238, %v231, %v233
    %v242 = vsel %vm238, %v237, %v231
    %v244 = vlaneseq
    %v245 = vshrl.u32 %v244, 7
    %v246 = vsub.s32 0, %v245
    %v247 = vrot.slane %v109, %v246
    %v248 = vlaneseq
    %v249 = vshrl.u32 %v248, 7
    %v250 = vsub.s32 1, %v249
    %v251 = vrot.slane %v109, %v250
    %v252 = vlaneseq
    %v253 = vshrl.u32 %v252, 7
    %v254 = vsub.s32 2, %v253
    %v255 = vrot.slane %v109, %v254
    %v256 = vlaneseq
    %v257 = vshrl.u32 %v256, 7
    %v258 = vsub.s32 3, %v257
    %v259 = vrot.slane %v109, %v258
    %v264 = vmul.f32 %v242, %v247
    %v265 = vmul.f32 %v241, %v251
    %v266 = vmul.f32 %v240, %v255
    %v267 = vmul.f32 %v239, %v259
    %268 = vrot.lane.b32.xlu0 %v100, 127
    %v269 = vpop.permute.xlu0 %268
    %270 = vrot.lane.b32.xlu0 %v101, 127
    %v271 = vpop.permute.xlu0 %270
    %272 = vrot.lane.b32.xlu0 %v102, 127
    %v273 = vpop.permute.xlu0 %272
    %274 = vrot.lane.b32.xlu0 %v103, 127
    %v275 = vpop.permute.xlu0 %274
    %vm276 = vcmp.lt.s32.totalorder %v123, 127
    %v277 = vsel %vm276, %v273, %v275
    %v278 = vsel %vm276, %v271, %v273
    %v279 = vsel %vm276, %v269, %v271
    %v280 = vsel %vm276, %v275, %v269
    %v282 = vlaneseq
    %v283 = vshrl.u32 %v282, 7
    %v284 = vsub.s32 0, %v283
    %v285 = vrot.slane %v110, %v284
    %v286 = vlaneseq
    %v287 = vshrl.u32 %v286, 7
    %v288 = vsub.s32 1, %v287
    %v289 = vrot.slane %v110, %v288
    %v290 = vlaneseq
    %v291 = vshrl.u32 %v290, 7
    %v292 = vsub.s32 2, %v291
    %v293 = vrot.slane %v110, %v292
    %v294 = vlaneseq
    %v295 = vshrl.u32 %v294, 7
    %v296 = vsub.s32 3, %v295
    %v297 = vrot.slane %v110, %v296
    %v302 = vmul.f32 %v279, %v285
    %v303 = vmul.f32 %v278, %v289
    %v304 = vmul.f32 %v277, %v293
    %v305 = vmul.f32 %v280, %v297
    %306 = vrot.lane.b32.xlu0 %v100, 113
    %v307 = vpop.permute.xlu0 %306
    %308 = vrot.lane.b32.xlu0 %v101, 113
    %v309 = vpop.permute.xlu0 %308
    %310 = vrot.lane.b32.xlu0 %v102, 113
    %v311 = vpop.permute.xlu0 %310
    %312 = vrot.lane.b32.xlu0 %v103, 113
    %v313 = vpop.permute.xlu0 %312
    %vm314 = vcmp.lt.s32.totalorder %v123, 113
    %v315 = vsel %vm314, %v311, %v313
    %v316 = vsel %vm314, %v309, %v311
    %v317 = vsel %vm314, %v307, %v309
    %v318 = vsel %vm314, %v313, %v307
    %v320 = vlaneseq
    %v321 = vshrl.u32 %v320, 7
    %v322 = vsub.s32 0, %v321
    %v323 = vrot.slane %v111, %v322
    %v324 = vlaneseq
    %v325 = vshrl.u32 %v324, 7
    %v326 = vsub.s32 1, %v325
    %v327 = vrot.slane %v111, %v326
    %v328 = vlaneseq
    %v329 = vshrl.u32 %v328, 7
    %v330 = vsub.s32 2, %v329
    %v331 = vrot.slane %v111, %v330
    %v332 = vlaneseq
    %v333 = vshrl.u32 %v332, 7
    %v334 = vsub.s32 3, %v333
    %v335 = vrot.slane %v111, %v334
    %v340 = vmul.f32 %v317, %v323
    %v341 = vmul.f32 %v316, %v327
    %v342 = vmul.f32 %v315, %v331
    %v343 = vmul.f32 %v318, %v335
    %344 = vrot.lane.b32.xlu0 %v100, 112
    %v345 = vpop.permute.xlu0 %344
    %346 = vrot.lane.b32.xlu0 %v101, 112
    %v347 = vpop.permute.xlu0 %346
    %348 = vrot.lane.b32.xlu0 %v102, 112
    %v349 = vpop.permute.xlu0 %348
    %350 = vrot.lane.b32.xlu0 %v103, 112
    %v351 = vpop.permute.xlu0 %350
    %vm352 = vcmp.lt.s32.totalorder %v123, 112
    %v353 = vsel %vm352, %v349, %v351
    %v354 = vsel %vm352, %v347, %v349
    %v355 = vsel %vm352, %v345, %v347
    %v356 = vsel %vm352, %v351, %v345
    %v358 = vlaneseq
    %v359 = vshrl.u32 %v358, 7
    %v360 = vsub.s32 0, %v359
    %v361 = vrot.slane %v112, %v360
    %v362 = vlaneseq
    %v363 = vshrl.u32 %v362, 7
    %v364 = vsub.s32 1, %v363
    %v365 = vrot.slane %v112, %v364
    %v366 = vlaneseq
    %v367 = vshrl.u32 %v366, 7
    %v368 = vsub.s32 2, %v367
    %v369 = vrot.slane %v112, %v368
    %v370 = vlaneseq
    %v371 = vshrl.u32 %v370, 7
    %v372 = vsub.s32 3, %v371
    %v373 = vrot.slane %v112, %v372
    %v378 = vmul.f32 %v355, %v361
    %v379 = vmul.f32 %v354, %v365
    %v380 = vmul.f32 %v353, %v369
    %v381 = vmul.f32 %v356, %v373
    %382 = vrot.lane.b32.xlu0 %v100, 111
    %v383 = vpop.permute.xlu0 %382
    %384 = vrot.lane.b32.xlu0 %v101, 111
    %v385 = vpop.permute.xlu0 %384
    %386 = vrot.lane.b32.xlu0 %v102, 111
    %v387 = vpop.permute.xlu0 %386
    %388 = vrot.lane.b32.xlu0 %v103, 111
    %v389 = vpop.permute.xlu0 %388
    %vm390 = vcmp.lt.s32.totalorder %v123, 111
    %v391 = vsel %vm390, %v387, %v389
    %v392 = vsel %vm390, %v385, %v387
    %v393 = vsel %vm390, %v383, %v385
    %v394 = vsel %vm390, %v389, %v383
    %v396 = vlaneseq
    %v397 = vshrl.u32 %v396, 7
    %v398 = vsub.s32 0, %v397
    %v399 = vrot.slane %v113, %v398
    %v400 = vlaneseq
    %v401 = vshrl.u32 %v400, 7
    %v402 = vsub.s32 1, %v401
    %v403 = vrot.slane %v113, %v402
    %v404 = vlaneseq
    %v405 = vshrl.u32 %v404, 7
    %v406 = vsub.s32 2, %v405
    %v407 = vrot.slane %v113, %v406
    %v408 = vlaneseq
    %v409 = vshrl.u32 %v408, 7
    %v410 = vsub.s32 3, %v409
    %v411 = vrot.slane %v113, %v410
    %v416 = vmul.f32 %v393, %v399
    %v417 = vmul.f32 %v392, %v403
    %v418 = vmul.f32 %v391, %v407
    %v419 = vmul.f32 %v394, %v411
    %421 = vset.pattern.permute.xlu0 0
    %422 = vperm.xlu0 %421, %v105
    %v423 = vpop.permute.xlu0 %422
    %vm425 = vcmask 588800
    %v427 = vsel %vm425, %v104, 0
    %429 = vmatprep.subr.mxu0 %v151
    %430 = vmatpush1.msra.mxu0 %v150
    %431 = vmatprep.subr.mxu0 %v189
    %432 = vmatpush1.msra.mxu0 %v188
    %433 = vmatprep.subr.mxu0 %v227
    %434 = vmatpush1.msra.mxu0 %v226
    %435 = vmatprep.subr.mxu0 %v265
    %436 = vmatpush1.msra.mxu0 %v264
    %437 = vmatprep.subr.mxu0 %v101
    %438 = vmatpush1.msra.mxu0 %v100
    %439 = vmatprep.subr.mxu0 %v303
    %440 = vmatpush1.msra.mxu0 %v302
    %441 = vmatprep.subr.mxu0 %v341
    %442 = vmatpush1.msra.mxu0 %v340
    %443 = vmatprep.subr.mxu0 %v379
    %444 = vmatpush1.msra.mxu0 %v378
    %445 = vmatprep.subr.mxu0 %v417
    %446 = vmatpush1.msra.mxu0 %v416
    %447 = vmatprep.subr.mxu0 0.0
    %448 = vmatpush1.msra.mxu0 0.0
    %449 = vmatprep.subr.mxu0 0.0
    %450 = vmatpush1.msra.mxu0 0.0
    %451 = vmatprep.subr.mxu0 0.0
    %452 = vmatpush1.msra.mxu0 0.0
    %453 = vmatprep.subr.mxu0 0.0
    %454 = vmatpush1.msra.mxu0 0.0
    %455 = vmatprep.subr.mxu0 0.0
    %456 = vmatpush1.msra.mxu0 0.0
    %457 = vmatprep.subr.mxu0 0.0
    %458 = vmatpush1.msra.mxu0 0.0
    %459 = vmatprep.subr.mxu0 0.0
    %460 = vmatpush1.msra.mxu0 0.0
    %461 = vmatprep.subr.mxu0 0.0
    %462 = vmatpush1.msra.mxu0 0.0
    %463 = vmatprep.subr.mxu0 0.0
    %464 = vmatpush1.msra.mxu0 0.0
    %465 = vmatprep.subr.mxu0 0.0
    %466 = vmatpush1.msra.mxu0 0.0
    %467 = vmatprep.subr.mxu0 0.0
    %468 = vmatpush1.msra.mxu0 0.0
    %469 = vmatprep.subr.mxu0 0.0
    %470 = vmatpush1.msra.mxu0 0.0
    %471 = vmatprep.subr.mxu0 0.0
    %472 = vmatpush1.msra.mxu0 0.0
    %473 = vmatprep.subr.mxu0 0.0
    %474 = vmatpush1.msra.mxu0 0.0
    %475 = vmatprep.subr.mxu0 0.0
    %476 = vmatpush1.msra.mxu0 0.0
    %477 = vmatprep.subr.mxu0 0.0
    %478 = vmatpush1.msra.mxu0 0.0
    %479 = vmatprep.subr.mxu0 0.0
    %480 = vmatpush1.msra.mxu0 0.0
    %481 = vmatprep.subr.mxu0 0.0
    %482 = vmatpush1.msra.mxu0 0.0
    %483 = vmatprep.subr.mxu0 0.0
    %484 = vmatpush1.msra.mxu0 0.0
    %485 = vmatprep.subr.mxu0 0.0
    %486 = vmatpush1.msra.mxu0 0.0
    %487 = vmatprep.subr.mxu0 0.0
    %488 = vmatpush1.msra.mxu0 0.0
    %489 = vmatprep.subr.mxu0 0.0
    %490 = vmatpush1.msra.mxu0 0.0
    %491 = vmatprep.subr.mxu0 0.0
    %492 = vmatpush1.msra.mxu0 0.0
    %493 = vmatprep.mubr.f32.mxu0 0.0
    %494 = vmatmul.mubr.f32.gmra.mrb[0].mxu0 %v427
    %v495 = vpop.f32.mrb[0].mxu0
    %v496 = vadd.f32 %v423, %v495
    %v497 = vpop.f32.mrb[0].mxu0
    %v498 = vadd.f32 %v423, %v497
    %499 = vdwg.mxu0
    %500 = vmatprep.subr.mxu0 %v153
    %501 = vmatpush1.msra.mxu0 %v152
    %502 = vmatprep.subr.mxu0 %v191
    %503 = vmatpush1.msra.mxu0 %v190
    %504 = vmatprep.subr.mxu0 %v229
    %505 = vmatpush1.msra.mxu0 %v228
    %506 = vmatprep.subr.mxu0 %v267
    %507 = vmatpush1.msra.mxu0 %v266
    %508 = vmatprep.subr.mxu0 %v103
    %509 = vmatpush1.msra.mxu0 %v102
    %510 = vmatprep.subr.mxu0 %v305
    %511 = vmatpush1.msra.mxu0 %v304
    %512 = vmatprep.subr.mxu0 %v343
    %513 = vmatpush1.msra.mxu0 %v342
    %514 = vmatprep.subr.mxu0 %v381
    %515 = vmatpush1.msra.mxu0 %v380
    %516 = vmatprep.subr.mxu0 %v419
    %517 = vmatpush1.msra.mxu0 %v418
    %518 = vmatprep.subr.mxu0 0.0
    %519 = vmatpush1.msra.mxu0 0.0
    %520 = vmatprep.subr.mxu0 0.0
    %521 = vmatpush1.msra.mxu0 0.0
    %522 = vmatprep.subr.mxu0 0.0
    %523 = vmatpush1.msra.mxu0 0.0
    %524 = vmatprep.subr.mxu0 0.0
    %525 = vmatpush1.msra.mxu0 0.0
    %526 = vmatprep.subr.mxu0 0.0
    %527 = vmatpush1.msra.mxu0 0.0
    %528 = vmatprep.subr.mxu0 0.0
    %529 = vmatpush1.msra.mxu0 0.0
    %530 = vmatprep.subr.mxu0 0.0
    %531 = vmatpush1.msra.mxu0 0.0
    %532 = vmatprep.subr.mxu0 0.0
    %533 = vmatpush1.msra.mxu0 0.0
    %534 = vmatprep.subr.mxu0 0.0
    %535 = vmatpush1.msra.mxu0 0.0
    %536 = vmatprep.subr.mxu0 0.0
    %537 = vmatpush1.msra.mxu0 0.0
    %538 = vmatprep.subr.mxu0 0.0
    %539 = vmatpush1.msra.mxu0 0.0
    %540 = vmatprep.subr.mxu0 0.0
    %541 = vmatpush1.msra.mxu0 0.0
    %542 = vmatprep.subr.mxu0 0.0
    %543 = vmatpush1.msra.mxu0 0.0
    %544 = vmatprep.subr.mxu0 0.0
    %545 = vmatpush1.msra.mxu0 0.0
    %546 = vmatprep.subr.mxu0 0.0
    %547 = vmatpush1.msra.mxu0 0.0
    %548 = vmatprep.subr.mxu0 0.0
    %549 = vmatpush1.msra.mxu0 0.0
    %550 = vmatprep.subr.mxu0 0.0
    %551 = vmatpush1.msra.mxu0 0.0
    %552 = vmatprep.subr.mxu0 0.0
    %553 = vmatpush1.msra.mxu0 0.0
    %554 = vmatprep.subr.mxu0 0.0
    %555 = vmatpush1.msra.mxu0 0.0
    %556 = vmatprep.subr.mxu0 0.0
    %557 = vmatpush1.msra.mxu0 0.0
    %558 = vmatprep.subr.mxu0 0.0
    %559 = vmatpush1.msra.mxu0 0.0
    %560 = vmatprep.subr.mxu0 0.0
    %561 = vmatpush1.msra.mxu0 0.0
    %562 = vmatprep.subr.mxu0 0.0
    %563 = vmatpush1.msra.mxu0 0.0
    %564 = vmatprep.mubr.f32.mxu0 0.0
    %565 = vmatmul.mubr.f32.gmra.mrb[0].mxu0 %v427
    %v566 = vpop.f32.mrb[0].mxu0
    %v567 = vadd.f32 %v423, %v566
    %v568 = vpop.f32.mrb[0].mxu0
    %v569 = vadd.f32 %v423, %v568
    %570 = vdwg.mxu0
    %v571 = vmax.f32 %v496, 0.0
    %v572 = vmax.f32 %v498, 0.0
    %v573 = vmax.f32 %v567, 0.0
    %v574 = vmax.f32 %v569, 0.0
    %v575 = vld [vmem:[#allocation5] sm:$0xff]
    %v576 = vld [vmem:[#allocation8] sm:$0xff]
    %v577 = vld [vmem:[%s6] sm:$0xff]
    %v578 = vld [vmem:[%s7] sm:$0x1]
    %v579 = vld [vmem:[%s7 + $0x1] sm:$0x1]
    %v580 = vld [vmem:[%s7 + $0x2] sm:$0x1]
    %v581 = vld [vmem:[%s7 + $0x3] sm:$0x1]
    %v582 = vld [vmem:[%s7 + $0x5] sm:$0x1]
    %v583 = vld [vmem:[%s7 + $0x6] sm:$0x1]
    %v584 = vld [vmem:[%s7 + $0x7] sm:$0x1]
    %v585 = vld [vmem:[%s7 + $0x8] sm:$0x1]
    %586 = vrot.lane.b32.xlu0 %v575, 9
    %v587 = vpop.permute.xlu0 %586
    %v589 = vlaneseq
    %v590 = vshrl.u32 %v589, 7
    %v591 = vsub.s32 0, %v590
    %v592 = vrot.slane %v578, %v591
    %v594 = vmul.f32 %v587, %v592
    %595 = vrot.lane.b32.xlu0 %v575, 8
    %v596 = vpop.permute.xlu0 %595
    %v598 = vlaneseq
    %v599 = vshrl.u32 %v598, 7
    %v600 = vsub.s32 0, %v599
    %v601 = vrot.slane %v579, %v600
    %v603 = vmul.f32 %v596, %v601
    %604 = vrot.lane.b32.xlu0 %v575, 7
    %v605 = vpop.permute.xlu0 %604
    %v607 = vlaneseq
    %v608 = vshrl.u32 %v607, 7
    %v609 = vsub.s32 0, %v608
    %v610 = vrot.slane %v580, %v609
    %v612 = vmul.f32 %v605, %v610
    %613 = vrot.lane.b32.xlu0 %v575, 1
    %v614 = vpop.permute.xlu0 %613
    %v616 = vlaneseq
    %v617 = vshrl.u32 %v616, 7
    %v618 = vsub.s32 0, %v617
    %v619 = vrot.slane %v581, %v618
    %v621 = vmul.f32 %v614, %v619
    %622 = vrot.lane.b32.xlu0 %v575, 127
    %v623 = vpop.permute.xlu0 %622
    %v625 = vlaneseq
    %v626 = vshrl.u32 %v625, 7
    %v627 = vsub.s32 0, %v626
    %v628 = vrot.slane %v582, %v627
    %v630 = vmul.f32 %v623, %v628
    %631 = vrot.lane.b32.xlu0 %v575, 121
    %v632 = vpop.permute.xlu0 %631
    %v634 = vlaneseq
    %v635 = vshrl.u32 %v634, 7
    %v636 = vsub.s32 0, %v635
    %v637 = vrot.slane %v583, %v636
    %v639 = vmul.f32 %v632, %v637
    %640 = vrot.lane.b32.xlu0 %v575, 120
    %v641 = vpop.permute.xlu0 %640
    %v643 = vlaneseq
    %v644 = vshrl.u32 %v643, 7
    %v645 = vsub.s32 0, %v644
    %v646 = vrot.slane %v584, %v645
    %v648 = vmul.f32 %v641, %v646
    %649 = vrot.lane.b32.xlu0 %v575, 119
    %v650 = vpop.permute.xlu0 %649
    %v652 = vlaneseq
    %v653 = vshrl.u32 %v652, 7
    %v654 = vsub.s32 0, %v653
    %v655 = vrot.slane %v585, %v654
    %v657 = vmul.f32 %v650, %v655
    %659 = vset.pattern.permute.xlu0 0
    %660 = vperm.xlu0 %659, %v577
    %v661 = vpop.permute.xlu0 %660
    %v664 = vsel %vm425, %v576, 0
    %666 = vmatprep.subr.mxu0 0.0
    %667 = vmatpush1.msra.mxu0 %v594
    %668 = vmatprep.subr.mxu0 0.0
    %669 = vmatpush1.msra.mxu0 %v603
    %670 = vmatprep.subr.mxu0 0.0
    %671 = vmatpush1.msra.mxu0 %v612
    %672 = vmatprep.subr.mxu0 0.0
    %673 = vmatpush1.msra.mxu0 %v621
    %674 = vmatprep.subr.mxu0 0.0
    %675 = vmatpush1.msra.mxu0 %v575
    %676 = vmatprep.subr.mxu0 0.0
    %677 = vmatpush1.msra.mxu0 %v630
    %678 = vmatprep.subr.mxu0 0.0
    %679 = vmatpush1.msra.mxu0 %v639
    %680 = vmatprep.subr.mxu0 0.0
    %681 = vmatpush1.msra.mxu0 %v648
    %682 = vmatprep.subr.mxu0 0.0
    %683 = vmatpush1.msra.mxu0 %v657
    %684 = vmatprep.subr.mxu0 0.0
    %685 = vmatpush1.msra.mxu0 0.0
    %686 = vmatprep.subr.mxu0 0.0
    %687 = vmatpush1.msra.mxu0 0.0
    %688 = vmatprep.subr.mxu0 0.0
    %689 = vmatpush1.msra.mxu0 0.0
    %690 = vmatprep.subr.mxu0 0.0
    %691 = vmatpush1.msra.mxu0 0.0
    %692 = vmatprep.subr.mxu0 0.0
    %693 = vmatpush1.msra.mxu0 0.0
    %694 = vmatprep.subr.mxu0 0.0
    %695 = vmatpush1.msra.mxu0 0.0
    %696 = vmatprep.subr.mxu0 0.0
    %697 = vmatpush1.msra.mxu0 0.0
    %698 = vmatprep.subr.mxu0 0.0
    %699 = vmatpush1.msra.mxu0 0.0
    %700 = vmatprep.subr.mxu0 0.0
    %701 = vmatpush1.msra.mxu0 0.0
    %702 = vmatprep.subr.mxu0 0.0
    %703 = vmatpush1.msra.mxu0 0.0
    %704 = vmatprep.subr.mxu0 0.0
    %705 = vmatpush1.msra.mxu0 0.0
    %706 = vmatprep.subr.mxu0 0.0
    %707 = vmatpush1.msra.mxu0 0.0
    %708 = vmatprep.subr.mxu0 0.0
    %709 = vmatpush1.msra.mxu0 0.0
    %710 = vmatprep.subr.mxu0 0.0
    %711 = vmatpush1.msra.mxu0 0.0
    %712 = vmatprep.subr.mxu0 0.0
    %713 = vmatpush1.msra.mxu0 0.0
    %714 = vmatprep.subr.mxu0 0.0
    %715 = vmatpush1.msra.mxu0 0.0
    %716 = vmatprep.subr.mxu0 0.0
    %717 = vmatpush1.msra.mxu0 0.0
    %718 = vmatprep.subr.mxu0 0.0
    %719 = vmatpush1.msra.mxu0 0.0
    %720 = vmatprep.subr.mxu0 0.0
    %721 = vmatpush1.msra.mxu0 0.0
    %722 = vmatprep.subr.mxu0 0.0
    %723 = vmatpush1.msra.mxu0 0.0
    %724 = vmatprep.subr.mxu0 0.0
    %725 = vmatpush1.msra.mxu0 0.0
    %726 = vmatprep.subr.mxu0 0.0
    %727 = vmatpush1.msra.mxu0 0.0
    %728 = vmatprep.subr.mxu0 0.0
    %729 = vmatpush1.msra.mxu0 0.0
    %730 = vmatprep.mubr.f32.mxu0 0.0
    %731 = vmatmul.mubr.f32.gmra.mrb[0].mxu0 %v664
    %v732 = vpop.f32.mrb[0].mxu0
    %v733 = vadd.f32 %v661, %v732
    %v734 = vpop.f32.mrb[0].mxu0
    %735 = vdwg.mxu0
    %v736 = vmax.f32 %v733, 0.0
    %vm737 = vcmask 64512
    %v739 = vsel %vm737, %v99, 0
    %741 = vmatprep.subr.mxu0 0.0
    %742 = vmatpush1.msra.mxu0 %v736
    %743 = vmatprep.subr.mxu0 0.0
    %744 = vmatpush1.msra.mxu0 0.0
    %745 = vmatprep.subr.mxu0 0.0
    %746 = vmatpush1.msra.mxu0 0.0
    %747 = vmatprep.subr.mxu0 0.0
    %748 = vmatpush1.msra.mxu0 0.0
    %749 = vmatprep.subr.mxu0 0.0
    %750 = vmatpush1.msra.mxu0 0.0
    %751 = vmatprep.subr.mxu0 0.0
    %752 = vmatpush1.msra.mxu0 0.0
    %753 = vmatprep.subr.mxu0 0.0
    %754 = vmatpush1.msra.mxu0 0.0
    %755 = vmatprep.subr.mxu0 0.0
    %756 = vmatpush1.msra.mxu0 0.0
    %757 = vmatprep.subr.mxu0 0.0
    %758 = vmatpush1.msra.mxu0 0.0
    %759 = vmatprep.subr.mxu0 0.0
    %760 = vmatpush1.msra.mxu0 0.0
    %761 = vmatprep.subr.mxu0 0.0
    %762 = vmatpush1.msra.mxu0 0.0
    %763 = vmatprep.subr.mxu0 0.0
    %764 = vmatpush1.msra.mxu0 0.0
    %765 = vmatprep.subr.mxu0 0.0
    %766 = vmatpush1.msra.mxu0 0.0
    %767 = vmatprep.subr.mxu0 0.0
    %768 = vmatpush1.msra.mxu0 0.0
    %769 = vmatprep.subr.mxu0 0.0
    %770 = vmatpush1.msra.mxu0 0.0
    %771 = vmatprep.subr.mxu0 0.0
    %772 = vmatpush1.msra.mxu0 0.0
    %773 = vmatprep.subr.mxu0 0.0
    %774 = vmatpush1.msra.mxu0 0.0
    %775 = vmatprep.subr.mxu0 0.0
    %776 = vmatpush1.msra.mxu0 0.0
    %777 = vmatprep.subr.mxu0 0.0
    %778 = vmatpush1.msra.mxu0 0.0
    %779 = vmatprep.subr.mxu0 0.0
    %780 = vmatpush1.msra.mxu0 0.0
    %781 = vmatprep.subr.mxu0 0.0
    %782 = vmatpush1.msra.mxu0 0.0
    %783 = vmatprep.subr.mxu0 0.0
    %784 = vmatpush1.msra.mxu0 0.0
    %785 = vmatprep.subr.mxu0 0.0
    %786 = vmatpush1.msra.mxu0 0.0
    %787 = vmatprep.subr.mxu0 0.0
    %788 = vmatpush1.msra.mxu0 0.0
    %789 = vmatprep.subr.mxu0 0.0
    %790 = vmatpush1.msra.mxu0 0.0
    %791 = vmatprep.subr.mxu0 0.0
    %792 = vmatpush1.msra.mxu0 0.0
    %793 = vmatprep.subr.mxu0 0.0
    %794 = vmatpush1.msra.mxu0 0.0
    %795 = vmatprep.subr.mxu0 0.0
    %796 = vmatpush1.msra.mxu0 0.0
    %797 = vmatprep.subr.mxu0 0.0
    %798 = vmatpush1.msra.mxu0 0.0
    %799 = vmatprep.subr.mxu0 0.0
    %800 = vmatpush1.msra.mxu0 0.0
    %801 = vmatprep.subr.mxu0 0.0
    %802 = vmatpush1.msra.mxu0 0.0
    %803 = vmatprep.subr.mxu0 0.0
    %804 = vmatpush1.msra.mxu0 0.0
    %805 = vmatprep.mubr.f32.mxu0 0.0
    %806 = vmatmul.mubr.f32.gmra.mrb[0].mxu0 %v739
    %v807 = vpop.f32.mrb[0].mxu0
    %v808 = vadd.f32 0.0, %v807
    %v809 = vpop.f32.mrb[0].mxu0
    %810 = vdwg.mxu0
    %v811 = vld [vmem:[#allocation10] sm:$0xff]
    %v812 = vld [vmem:[#allocation10 + $0x8] sm:$0xff]
    %v813 = vld [vmem:[#allocation10 + $0x10] sm:$0xff]
    %v814 = vld [vmem:[#allocation10 + $0x18] sm:$0xff]
    %v815 = vld [vmem:[#allocation10 + $0x20] sm:$0xff]
    %v816 = vld [vmem:[#allocation10 + $0x28] sm:$0xff]
    %v817 = vld [vmem:[#allocation10 + $0x30] sm:$0xff]
    %v818 = vld [vmem:[#allocation10 + $0x38] sm:$0xff]
    %v819 = vld [vmem:[#allocation10 + $0x40] sm:$0xff]
    %v820 = vld [vmem:[#allocation10 + $0x48] sm:$0xff]
    %v821 = vld [vmem:[#allocation10 + $0x50] sm:$0xff]
    %v822 = vld [vmem:[#allocation10 + $0x58] sm:$0xff]
    %v823 = vld [vmem:[#allocation10 + $0x60] sm:$0xff]
    %v824 = vld [vmem:[#allocation10 + $0x68] sm:$0xff]
    %v825 = vld [vmem:[#allocation10 + $0x70] sm:$0xff]
    %v826 = vld [vmem:[#allocation10 + $0x78] sm:$0xff]
    %v827 = vld [vmem:[#allocation10 + $0x80] sm:$0xff]
    %v828 = vld [vmem:[#allocation10 + $0x88] sm:$0xff]
    %v829 = vld [vmem:[#allocation10 + $0x90] sm:$0xff]
    %v830 = vld [vmem:[#allocation10 + $0x98] sm:$0xff]
    %v831 = vld [vmem:[#allocation10 + $0xa0] sm:$0xff]
    %v832 = vld [vmem:[#allocation10 + $0xa8] sm:$0xff]
    %v833 = vld [vmem:[#allocation10 + $0xb0] sm:$0xff]
    %v834 = vld [vmem:[#allocation10 + $0xb8] sm:$0xff]
    %v835 = vld [vmem:[#allocation10 + $0xc0] sm:$0xff]
    %v836 = vld [vmem:[#allocation10 + $0xc8] sm:$0xff]
    %v837 = vld [vmem:[#allocation10 + $0xd0] sm:$0xff]
    %v838 = vld [vmem:[#allocation10 + $0xd8] sm:$0xff]
    %v839 = vld [vmem:[#allocation10 + $0xe0] sm:$0xff]
    %v840 = vld [vmem:[#allocation10 + $0xe8] sm:$0xff]
    %v841 = vld [vmem:[#allocation10 + $0xf0] sm:$0xff]
    %v842 = vld [vmem:[#allocation10 + $0xf8] sm:$0xff]
    %v843 = vld [vmem:[#allocation10 + $0x100] sm:$0xff]
    %v844 = vld [vmem:[#allocation10 + $0x108] sm:$0xff]
    %v845 = vld [vmem:[#allocation10 + $0x110] sm:$0xff]
    %v846 = vld [vmem:[#allocation10 + $0x118] sm:$0xff]
    %v847 = vld [vmem:[#allocation10 + $0x120] sm:$0xff]
    %v848 = vld [vmem:[#allocation10 + $0x128] sm:$0xff]
    %v849 = vld [vmem:[#allocation10 + $0x130] sm:$0xff]
    %v850 = vld [vmem:[#allocation10 + $0x138] sm:$0xff]
    %v851 = vld [vmem:[#allocation10 + $0x140] sm:$0xff]
    %v852 = vld [vmem:[#allocation10 + $0x148] sm:$0xff]
    %v853 = vld [vmem:[#allocation10 + $0x150] sm:$0xff]
    %v854 = vld [vmem:[#allocation10 + $0x158] sm:$0xff]
    %v855 = vld [vmem:[#allocation10 + $0x160] sm:$0xff]
    %v856 = vld [vmem:[#allocation10 + $0x168] sm:$0xff]
    %v857 = vld [vmem:[#allocation10 + $0x170] sm:$0xff]
    %v858 = vld [vmem:[#allocation10 + $0x178] sm:$0xff]
    %v859 = vld [vmem:[#allocation10 + $0x180] sm:$0xff]
    %v860 = vld [vmem:[#allocation10 + $0x188] sm:$0xff]
    %v861 = vld [vmem:[#allocation10 + $0x190] sm:$0xff]
    %v862 = vld [vmem:[#allocation10 + $0x198] sm:$0xff]
    %v863 = vld [vmem:[#allocation10 + $0x1a0] sm:$0xff]
    %v864 = vld [vmem:[#allocation10 + $0x1a8] sm:$0xff]
    %v865 = vld [vmem:[#allocation10 + $0x1b0] sm:$0xff]
    %v866 = vld [vmem:[#allocation10 + $0x1b8] sm:$0xff]
    %v867 = vld [vmem:[#allocation10 + $0x1c0] sm:$0xff]
    %v868 = vld [vmem:[#allocation10 + $0x1c8] sm:$0xff]
    %v869 = vld [vmem:[#allocation10 + $0x1d0] sm:$0xff]
    %v870 = vld [vmem:[#allocation10 + $0x1d8] sm:$0xff]
    %v871 = vld [vmem:[#allocation10 + $0x1e0] sm:$0xff]
    %v872 = vld [vmem:[#allocation10 + $0x1e8] sm:$0xff]
    %v873 = vld [vmem:[#allocation10 + $0x1f0] sm:$0xff]
    %v874 = vld [vmem:[#allocation10 + $0x1f8] sm:$0xff]
    %875 = vmatprep.subr.mxu0 %v812
    %876 = vmatpush1.msra.mxu0 %v811
    %877 = vmatprep.subr.mxu0 %v816
    %878 = vmatpush1.msra.mxu0 %v815
    %879 = vmatprep.subr.mxu0 %v820
    %880 = vmatpush1.msra.mxu0 %v819
    %881 = vmatprep.subr.mxu0 %v824
    %882 = vmatpush1.msra.mxu0 %v823
    %883 = vmatprep.subr.mxu0 %v828
    %884 = vmatpush1.msra.mxu0 %v827
    %885 = vmatprep.subr.mxu0 %v832
    %886 = vmatpush1.msra.mxu0 %v831
    %887 = vmatprep.subr.mxu0 %v836
    %888 = vmatpush1.msra.mxu0 %v835
    %889 = vmatprep.subr.mxu0 %v840
    %890 = vmatpush1.msra.mxu0 %v839
    %891 = vmatprep.subr.mxu0 %v844
    %892 = vmatpush1.msra.mxu0 %v843
    %893 = vmatprep.subr.mxu0 %v848
    %894 = vmatpush1.msra.mxu0 %v847
    %895 = vmatprep.subr.mxu0 %v852
    %896 = vmatpush1.msra.mxu0 %v851
    %897 = vmatprep.subr.mxu0 %v856
    %898 = vmatpush1.msra.mxu0 %v855
    %899 = vmatprep.subr.mxu0 %v860
    %900 = vmatpush1.msra.mxu0 %v859
    %901 = vmatprep.subr.mxu0 %v864
    %902 = vmatpush1.msra.mxu0 %v863
    %903 = vmatprep.subr.mxu0 %v868
    %904 = vmatpush1.msra.mxu0 %v867
    %905 = vmatprep.subr.mxu0 %v872
    %906 = vmatpush1.msra.mxu0 %v871
    %907 = vmatprep.subr.mxu0 0.0
    %908 = vmatpush1.msra.mxu0 0.0
    %909 = vmatprep.subr.mxu0 0.0
    %910 = vmatpush1.msra.mxu0 0.0
    %911 = vmatprep.subr.mxu0 0.0
    %912 = vmatpush1.msra.mxu0 0.0
    %913 = vmatprep.subr.mxu0 0.0
    %914 = vmatpush1.msra.mxu0 0.0
    %915 = vmatprep.subr.mxu0 0.0
    %916 = vmatpush1.msra.mxu0 0.0
    %917 = vmatprep.subr.mxu0 0.0
    %918 = vmatpush1.msra.mxu0 0.0
    %919 = vmatprep.subr.mxu0 0.0
    %920 = vmatpush1.msra.mxu0 0.0
    %921 = vmatprep.subr.mxu0 0.0
    %922 = vmatpush1.msra.mxu0 0.0
    %923 = vmatprep.subr.mxu0 0.0
    %924 = vmatpush1.msra.mxu0 0.0
    %925 = vmatprep.subr.mxu0 0.0
    %926 = vmatpush1.msra.mxu0 0.0
    %927 = vmatprep.subr.mxu0 0.0
    %928 = vmatpush1.msra.mxu0 0.0
    %929 = vmatprep.subr.mxu0 0.0
    %930 = vmatpush1.msra.mxu0 0.0
    %931 = vmatprep.subr.mxu0 0.0
    %932 = vmatpush1.msra.mxu0 0.0
    %933 = vmatprep.subr.mxu0 0.0
    %934 = vmatpush1.msra.mxu0 0.0
    %935 = vmatprep.subr.mxu0 0.0
    %936 = vmatpush1.msra.mxu0 0.0
    %937 = vmatprep.subr.mxu0 0.0
    %938 = vmatpush1.msra.mxu0 0.0
    %939 = vmatprep.mubr.f32.mxu0 0.0
    %940 = vmatmul.mubr.f32.gmra.mrb[0].mxu0 %v808
    %v941 = vpop.f32.mrb[0].mxu0
    %v942 = vadd.f32 0.0, %v941
    %v943 = vpop.f32.mrb[0].mxu0
    %v944 = vadd.f32 0.0, %v943
    %945 = vdwg.mxu0
    %946 = vmatprep.subr.mxu0 %v814
    %947 = vmatpush1.msra.mxu0 %v813
    %948 = vmatprep.subr.mxu0 %v818
    %949 = vmatpush1.msra.mxu0 %v817
    %950 = vmatprep.subr.mxu0 %v822
    %951 = vmatpush1.msra.mxu0 %v821
    %952 = vmatprep.subr.mxu0 %v826
    %953 = vmatpush1.msra.mxu0 %v825
    %954 = vmatprep.subr.mxu0 %v830
    %955 = vmatpush1.msra.mxu0 %v829
    %956 = vmatprep.subr.mxu0 %v834
    %957 = vmatpush1.msra.mxu0 %v833
    %958 = vmatprep.subr.mxu0 %v838
    %959 = vmatpush1.msra.mxu0 %v837
    %960 = vmatprep.subr.mxu0 %v842
    %961 = vmatpush1.msra.mxu0 %v841
    %962 = vmatprep.subr.mxu0 %v846
    %963 = vmatpush1.msra.mxu0 %v845
    %964 = vmatprep.subr.mxu0 %v850
    %965 = vmatpush1.msra.mxu0 %v849
    %966 = vmatprep.subr.mxu0 %v854
    %967 = vmatpush1.msra.mxu0 %v853
    %968 = vmatprep.subr.mxu0 %v858
    %969 = vmatpush1.msra.mxu0 %v857
    %970 = vmatprep.subr.mxu0 %v862
    %971 = vmatpush1.msra.mxu0 %v861
    %972 = vmatprep.subr.mxu0 %v866
    %973 = vmatpush1.msra.mxu0 %v865
    %974 = vmatprep.subr.mxu0 %v870
    %975 = vmatpush1.msra.mxu0 %v869
    %976 = vmatprep.subr.mxu0 %v874
    %977 = vmatpush1.msra.mxu0 %v873
    %978 = vmatprep.subr.mxu0 0.0
    %979 = vmatpush1.msra.mxu0 0.0
    %980 = vmatprep.subr.mxu0 0.0
    %981 = vmatpush1.msra.mxu0 0.0
    %982 = vmatprep.subr.mxu0 0.0
    %983 = vmatpush1.msra.mxu0 0.0
    %984 = vmatprep.subr.mxu0 0.0
    %985 = vmatpush1.msra.mxu0 0.0
    %986 = vmatprep.subr.mxu0 0.0
    %987 = vmatpush1.msra.mxu0 0.0
    %988 = vmatprep.subr.mxu0 0.0
    %989 = vmatpush1.msra.mxu0 0.0
    %990 = vmatprep.subr.mxu0 0.0
    %991 = vmatpush1.msra.mxu0 0.0
    %992 = vmatprep.subr.mxu0 0.0
    %993 = vmatpush1.msra.mxu0 0.0
    %994 = vmatprep.subr.mxu0 0.0
    %995 = vmatpush1.msra.mxu0 0.0
    %996 = vmatprep.subr.mxu0 0.0
    %997 = vmatpush1.msra.mxu0 0.0
    %998 = vmatprep.subr.mxu0 0.0
    %999 = vmatpush1.msra.mxu0 0.0
    %1000 = vmatprep.subr.mxu0 0.0
    %1001 = vmatpush1.msra.mxu0 0.0
    %1002 = vmatprep.subr.mxu0 0.0
    %1003 = vmatpush1.msra.mxu0 0.0
    %1004 = vmatprep.subr.mxu0 0.0
    %1005 = vmatpush1.msra.mxu0 0.0
    %1006 = vmatprep.subr.mxu0 0.0
    %1007 = vmatpush1.msra.mxu0 0.0
    %1008 = vmatprep.subr.mxu0 0.0
    %1009 = vmatpush1.msra.mxu0 0.0
    %1010 = vmatprep.mubr.f32.mxu0 0.0
    %1011 = vmatmul.mubr.f32.gmra.mrb[0].mxu0 %v808
    %v1012 = vpop.f32.mrb[0].mxu0
    %v1013 = vadd.f32 0.0, %v1012
    %v1014 = vpop.f32.mrb[0].mxu0
    %v1015 = vadd.f32 0.0, %v1014
    %1016 = vdwg.mxu0
    %1017 = vmatprep.subr.mxu0 %v572
    %1018 = vmatpush1.msra.mxu0 %v571
    %1019 = vmatprep.subr.mxu0 0.0
    %1020 = vmatpush1.msra.mxu0 0.0
    %1021 = vmatprep.subr.mxu0 0.0
    %1022 = vmatpush1.msra.mxu0 0.0
    %1023 = vmatprep.subr.mxu0 0.0
    %1024 = vmatpush1.msra.mxu0 0.0
    %1025 = vmatprep.subr.mxu0 0.0
    %1026 = vmatpush1.msra.mxu0 0.0
    %1027 = vmatprep.subr.mxu0 0.0
    %1028 = vmatpush1.msra.mxu0 0.0
    %1029 = vmatprep.subr.mxu0 0.0
    %1030 = vmatpush1.msra.mxu0 0.0
    %1031 = vmatprep.subr.mxu0 0.0
    %1032 = vmatpush1.msra.mxu0 0.0
    %1033 = vmatprep.subr.mxu0 0.0
    %1034 = vmatpush1.msra.mxu0 0.0
    %1035 = vmatprep.subr.mxu0 0.0
    %1036 = vmatpush1.msra.mxu0 0.0
    %1037 = vmatprep.subr.mxu0 0.0
    %1038 = vmatpush1.msra.mxu0 0.0
    %1039 = vmatprep.subr.mxu0 0.0
    %1040 = vmatpush1.msra.mxu0 0.0
    %1041 = vmatprep.subr.mxu0 0.0
    %1042 = vmatpush1.msra.mxu0 0.0
    %1043 = vmatprep.subr.mxu0 0.0
    %1044 = vmatpush1.msra.mxu0 0.0
    %1045 = vmatprep.subr.mxu0 0.0
    %1046 = vmatpush1.msra.mxu0 0.0
    %1047 = vmatprep.subr.mxu0 0.0
    %1048 = vmatpush1.msra.mxu0 0.0
    %1049 = vmatprep.subr.mxu0 0.0
    %1050 = vmatpush1.msra.mxu0 0.0
    %1051 = vmatprep.subr.mxu0 0.0
    %1052 = vmatpush1.msra.mxu0 0.0
    %1053 = vmatprep.subr.mxu0 0.0
    %1054 = vmatpush1.msra.mxu0 0.0
    %1055 = vmatprep.subr.mxu0 0.0
    %1056 = vmatpush1.msra.mxu0 0.0
    %1057 = vmatprep.subr.mxu0 0.0
    %1058 = vmatpush1.msra.mxu0 0.0
    %1059 = vmatprep.subr.mxu0 0.0
    %1060 = vmatpush1.msra.mxu0 0.0
    %1061 = vmatprep.subr.mxu0 0.0
    %1062 = vmatpush1.msra.mxu0 0.0
    %1063 = vmatprep.subr.mxu0 0.0
    %1064 = vmatpush1.msra.mxu0 0.0
    %1065 = vmatprep.subr.mxu0 0.0
    %1066 = vmatpush1.msra.mxu0 0.0
    %1067 = vmatprep.subr.mxu0 0.0
    %1068 = vmatpush1.msra.mxu0 0.0
    %1069 = vmatprep.subr.mxu0 0.0
    %1070 = vmatpush1.msra.mxu0 0.0
    %1071 = vmatprep.subr.mxu0 0.0
    %1072 = vmatpush1.msra.mxu0 0.0
    %1073 = vmatprep.subr.mxu0 0.0
    %1074 = vmatpush1.msra.mxu0 0.0
    %1075 = vmatprep.subr.mxu0 0.0
    %1076 = vmatpush1.msra.mxu0 0.0
    %1077 = vmatprep.subr.mxu0 0.0
    %1078 = vmatpush1.msra.mxu0 0.0
    %1079 = vmatprep.subr.mxu0 0.0
    %1080 = vmatpush1.msra.mxu0 0.0
    %1081 = vmatprep.mubr.f32.mxu0 0.0
    %1082 = vmatmul.mubr.f32.gmra.mrb[0].mxu0 %v739
    %v1083 = vpop.f32.mrb[0].mxu0
    %v1084 = vadd.f32 %v942, %v1083
    %v1085 = vpop.f32.mrb[0].mxu0
    %v1086 = vadd.f32 %v944, %v1085
    %1087 = vdwg.mxu0
    %1088 = vmatprep.subr.mxu0 %v574
    %1089 = vmatpush1.msra.mxu0 %v573
    %1090 = vmatprep.subr.mxu0 0.0
    %1091 = vmatpush1.msra.mxu0 0.0
    %1092 = vmatprep.subr.mxu0 0.0
    %1093 = vmatpush1.msra.mxu0 0.0
    %1094 = vmatprep.subr.mxu0 0.0
    %1095 = vmatpush1.msra.mxu0 0.0
    %1096 = vmatprep.subr.mxu0 0.0
    %1097 = vmatpush1.msra.mxu0 0.0
    %1098 = vmatprep.subr.mxu0 0.0
    %1099 = vmatpush1.msra.mxu0 0.0
    %1100 = vmatprep.subr.mxu0 0.0
    %1101 = vmatpush1.msra.mxu0 0.0
    %1102 = vmatprep.subr.mxu0 0.0
    %1103 = vmatpush1.msra.mxu0 0.0
    %1104 = vmatprep.subr.mxu0 0.0
    %1105 = vmatpush1.msra.mxu0 0.0
    %1106 = vmatprep.subr.mxu0 0.0
    %1107 = vmatpush1.msra.mxu0 0.0
    %1108 = vmatprep.subr.mxu0 0.0
    %1109 = vmatpush1.msra.mxu0 0.0
    %1110 = vmatprep.subr.mxu0 0.0
    %1111 = vmatpush1.msra.mxu0 0.0
    %1112 = vmatprep.subr.mxu0 0.0
    %1113 = vmatpush1.msra.mxu0 0.0
    %1114 = vmatprep.subr.mxu0 0.0
    %1115 = vmatpush1.msra.mxu0 0.0
    %1116 = vmatprep.subr.mxu0 0.0
    %1117 = vmatpush1.msra.mxu0 0.0
    %1118 = vmatprep.subr.mxu0 0.0
    %1119 = vmatpush1.msra.mxu0 0.0
    %1120 = vmatprep.subr.mxu0 0.0
    %1121 = vmatpush1.msra.mxu0 0.0
    %1122 = vmatprep.subr.mxu0 0.0
    %1123 = vmatpush1.msra.mxu0 0.0
    %1124 = vmatprep.subr.mxu0 0.0
    %1125 = vmatpush1.msra.mxu0 0.0
    %1126 = vmatprep.subr.mxu0 0.0
    %1127 = vmatpush1.msra.mxu0 0.0
    %1128 = vmatprep.subr.mxu0 0.0
    %1129 = vmatpush1.msra.mxu0 0.0
    %1130 = vmatprep.subr.mxu0 0.0
    %1131 = vmatpush1.msra.mxu0 0.0
    %1132 = vmatprep.subr.mxu0 0.0
    %1133 = vmatpush1.msra.mxu0 0.0
    %1134 = vmatprep.subr.mxu0 0.0
    %1135 = vmatpush1.msra.mxu0 0.0
    %1136 = vmatprep.subr.mxu0 0.0
    %1137 = vmatpush1.msra.mxu0 0.0
    %1138 = vmatprep.subr.mxu0 0.0
    %1139 = vmatpush1.msra.mxu0 0.0
    %1140 = vmatprep.subr.mxu0 0.0
    %1141 = vmatpush1.msra.mxu0 0.0
    %1142 = vmatprep.subr.mxu0 0.0
    %1143 = vmatpush1.msra.mxu0 0.0
    %1144 = vmatprep.subr.mxu0 0.0
    %1145 = vmatpush1.msra.mxu0 0.0
    %1146 = vmatprep.subr.mxu0 0.0
    %1147 = vmatpush1.msra.mxu0 0.0
    %1148 = vmatprep.subr.mxu0 0.0
    %1149 = vmatpush1.msra.mxu0 0.0
    %1150 = vmatprep.subr.mxu0 0.0
    %1151 = vmatpush1.msra.mxu0 0.0
    %1152 = vmatprep.mubr.f32.mxu0 0.0
    %1153 = vmatmul.mubr.f32.gmra.mrb[0].mxu0 %v739
    %v1154 = vpop.f32.mrb[0].mxu0
    %v1155 = vadd.f32 %v1013, %v1154
    %v1156 = vpop.f32.mrb[0].mxu0
    %v1157 = vadd.f32 %v1015, %v1156
    %1158 = vdwg.mxu0
    %v1159 = vld [vmem:[%s10] sm:$0x7]
    %1161 = vset.pattern.permute.xlu0 0
    %1162 = vperm.xlu0 %1161, %v1159
    %v1163 = vpop.permute.xlu0 %1162
    %v1165 = vadd.f32 %v1084, %v1163
    %v1166 = vadd.f32 %v1086, %v1163
    %v1167 = vadd.f32 %v1155, %v1163
    %v1168 = vadd.f32 %v1157, %v1163
    %v1173 = vcombine.low %v1165, %v1166
    %v1174 = vcombine.low %v1167, %v1168
    %1177 = vst [vmem:[#allocation11] sm:$0x77] %v1173
    %1178 = vst [vmem:[#allocation11 + $0x8] sm:$0x77] %v1174
    // Predicated region
    $region66: #{tpu_custom_call.1} parent=1 // pred_check
      _
    $region67: #{tpu_custom_call.1} parent=1 // pred_check_branch
      %1180 = sbr.rel (0) target = $region69
    $region68: #{tpu_custom_call.1} parent=1 // pred_region
      %s1182 = ssub.s32 256, 256
      %1183 = vsyncadd [#allocation4], %s1182
      %s1185 = sshll.u32 [#allocation11], 4
      %s1186 = int_to_ptr.vmem [resolvable:$true] %s1185
      %1188 = dma.vmem_to_hbm [thread:$0]  %s1186, 256, %s11, [#allocation4]
    $region69: #{tpu_custom_call.1} parent=1 // pred_fallthru
      _
    // Predicated region
    $region70: #{tpu_custom_call.1} parent=1 // pred_check
      _
    $region71: #{tpu_custom_call.1} parent=1 // pred_check_branch
      %1190 = sbr.rel (0) target = $region73
    $region72: #{tpu_custom_call.1} parent=1 // pred_region
      %1191 = dma.done [#allocation4], 256
    $region73: #{tpu_custom_call.1} parent=1 // pred_fallthru
      _
    %1192 = vsyncpa [#allocation3], 1
    %1193 = vsyncpa [#allocation6], 1
    %1194 = vsyncpa [#allocation9], 1
    %1195 = vsyncpa [#allocation4], 1

</llo_original>
